<compile_context>
chip_gen: v6e
topology: v6e:2x2x1
jax: 0.10.0
libtpu: 0.0.40
codegen_flags: <defaults>
</compile_context>

<pallas_src>
import math

import jax
import jax.numpy as jnp
from jax import lax
from jax.experimental import pallas as pl
from jax.experimental.pallas import tpu as pltpu

# ---- model config (TransformerEncoderLayer(d_model=32, nhead=4, dim_ff=64)) ----
D_MODEL = 32
NHEAD = 4
HEAD_DIM = D_MODEL // NHEAD
DIM_FF = 64
NUM_LAYERS = 2
SEQ = 8
BATCH = 2
EPS = 1e-5                       # LayerNorm eps (PyTorch default)
MATMUL_DTYPE = jnp.bfloat16      # MXU operand dtype (accumulation is always f32)

# ---- packed small-parameter slab: one (8, 128) vreg per layer, each segment on
# ---- its own sublane row starting at lane 0 (no lane rotate needed to extract):
#   row 0: bqkv (96)   row 1: bo (32)   row 2: b1 (64)   row 3: b2 (32)
#   row 4: g1 (32)     row 5: be1 (32)  row 6: g2 (32)   row 7: be2 (32)
PV_ROWS = 8
PV_LANES = 128


def _fused_encoder_kernel(x_ref, wqkv_ref, wo_ref, w1_ref, w2_ref, pv_ref, hs_ref):
    """One program = one batch element. All layers statically unrolled.

    x_ref    : (S, D)      activations of this batch element (f32)
    wqkv_ref : (L, D, 3D)  fused QKV projection, pre-transposed, bf16,
                           1/sqrt(HEAD_DIM) pre-folded into the Q columns
    wo_ref   : (L, D, D)   attention output projection, pre-transposed, bf16
    w1_ref   : (L, D, FF)  linear1, pre-transposed, bf16
    w2_ref   : (L, FF, D)  linear2, pre-transposed, bf16
    pv_ref   : (L, 8, 128) packed biases + LayerNorm params (f32)
    hs_ref   : (L, S, D)   per-layer outputs (hidden_states) for this batch elem
    """
    x = x_ref[...].astype(jnp.float32)                                  # (S, D)

    for l in range(NUM_LAYERS):      # static unroll: activations stay in VMEM
        wqkv = wqkv_ref[l]           # (D, 3D) bf16
        wo = wo_ref[l]               # (D, D)  bf16
        w1 = w1_ref[l]               # (D, FF) bf16
        w2 = w2_ref[l]               # (FF, D) bf16
        pv = pv_ref[l]               # (8, 128) f32

        bqkv = pv[0:1, 0:3 * D_MODEL]
        bo = pv[1:2, 0:D_MODEL]
        b1 = pv[2:3, 0:DIM_FF]
        b2 = pv[3:4, 0:D_MODEL]
        g1 = pv[4:5, 0:D_MODEL]
        be1 = pv[5:6, 0:D_MODEL]
        g2 = pv[6:7, 0:D_MODEL]
        be2 = pv[7:8, 0:D_MODEL]

        # ---- fused QKV projection (bf16 MXU operands, f32 accumulation) ----
        qkv = jnp.dot(x.astype(MATMUL_DTYPE), wqkv,
                      preferred_element_type=jnp.float32) + bqkv        # (S, 3D)

        # ---- multi-head attention: all heads in one batched matmul each ----
        # Heads are contiguous lane slices; stack them into a leading batch dim.
        q = jnp.stack([qkv[:, h * HEAD_DIM:(h + 1) * HEAD_DIM]
                       for h in range(NHEAD)], axis=0)                  # (H, S, HD)
        k = jnp.stack([qkv[:, D_MODEL + h * HEAD_DIM:
                              D_MODEL + (h + 1) * HEAD_DIM]
                       for h in range(NHEAD)], axis=0)
        v = jnp.stack([qkv[:, 2 * D_MODEL + h * HEAD_DIM:
                              2 * D_MODEL + (h + 1) * HEAD_DIM]
                       for h in range(NHEAD)], axis=0)

        # (1/sqrt(HEAD_DIM) already folded into wqkv / bqkv at init time.)
        s = jnp.einsum('hqd,hkd->hqk', q, k,
                       preferred_element_type=jnp.float32)              # (H, S, S)
        s = s - jnp.max(s, axis=-1, keepdims=True)
        p = jnp.exp(s)
        p = p * pl.reciprocal(jnp.sum(p, axis=-1, keepdims=True), approx=True)
        ctx = jnp.einsum('hqk,hkd->hqd', p, v,
                         preferred_element_type=jnp.float32)            # (H, S, HD)

        # Heads back as contiguous lane slices -> ONE output projection (K = D).
        ctx2d = jnp.concatenate([ctx[h] for h in range(NHEAD)], axis=-1)  # (S, D)
        attn_out = jnp.dot(ctx2d.astype(MATMUL_DTYPE), wo,
                           preferred_element_type=jnp.float32) + bo

        # ---- residual + LayerNorm1 (f32 statistics) ----
        y = x + attn_out
        mu = jnp.mean(y, axis=-1, keepdims=True)
        var = jnp.mean((y - mu) ** 2, axis=-1, keepdims=True)
        y = (y - mu) * lax.rsqrt(var + EPS) * g1 + be1

        # ---- FFN (linear1 -> ReLU -> linear2) + residual + LayerNorm2 ----
        h1 = jnp.maximum(jnp.dot(y.astype(MATMUL_DTYPE), w1,
                                 preferred_element_type=jnp.float32) + b1, 0.0)
        f = jnp.dot(h1.astype(MATMUL_DTYPE), w2,
                    preferred_element_type=jnp.float32) + b2
        z = y + f
        mu2 = jnp.mean(z, axis=-1, keepdims=True)
        var2 = jnp.mean((z - mu2) ** 2, axis=-1, keepdims=True)
        z = (z - mu2) * lax.rsqrt(var2 + EPS) * g2 + be2

        hs_ref[l] = z.astype(hs_ref.dtype)
        x = z


def transformer_encoder_forward(src, kernel_params):
    """_TransformerEncoder.forward: src (S, B, D) -> (output, hidden_states)."""
    # TODO(synk): src_mask / src_key_padding_mask not implemented (inputs are None).
    S, B, D = src.shape
    x_bsd = jnp.transpose(src, (1, 0, 2))     # (B, S, D): batch-major for the grid

    wqkv = kernel_params["wqkv"]   # (L, D, 3D) bf16
    wo = kernel_params["wo"]       # (L, D, D)  bf16
    w1 = kernel_params["w1"]       # (L, D, FF) bf16
    w2 = kernel_params["w2"]       # (L, FF, D) bf16
    pv = kernel_params["pvec"]     # (L, 8, 128) f32

    def bcast_spec(a):   # whole array, same block for every program (stays resident)
        return pl.BlockSpec(a.shape, lambda b, _nd=a.ndim: (0,) * _nd)

    hs = pl.pallas_call(
        _fused_encoder_kernel,
        out_shape=jax.ShapeDtypeStruct((B, NUM_LAYERS, S, D), src.dtype),
        grid=(B,),
        in_specs=[pl.BlockSpec((None, S, D), lambda b: (b, 0, 0)),
                  bcast_spec(wqkv), bcast_spec(wo),
                  bcast_spec(w1), bcast_spec(w2), bcast_spec(pv)],
        out_specs=pl.BlockSpec((None, NUM_LAYERS, S, D), lambda b: (b, 0, 0, 0)),
        compiler_params=pltpu.CompilerParams(
            # Batch axis is embarrassingly parallel -> megacore sharding on v7x.
            dimension_semantics=("parallel",),
            # Toy sizes fit trivially; re-derive per generation at real sizes
            # (16 MiB default scoped on v5e, 32 MiB v6e/v7x, 64 MiB physical v7x).
            vmem_limit_bytes=32 * 1024 * 1024,
        ),
        # TODO(synk): at real L/D/FF sizes, stream layers with a second
        # ("arbitrary") grid axis + per-layer weight BlockSpecs (index_map
        # lambda b, l: (l, 0, 0)) instead of keeping all layers resident.
    )(x_bsd, wqkv, wo, w1, w2, pv)

    hs = jnp.transpose(hs, (1, 2, 0, 3))      # (L, S, B, D): seq-first layout again
    hidden_states = [hs[l] for l in range(NUM_LAYERS)]
    output = hidden_states[-1]
    return output, hidden_states


def init_layer_params(key):
    """Deterministic synthetic init matching nn.TransformerEncoderLayer parameter
    shapes (raw PyTorch layout: weight[out, in])."""
    ks = jax.random.split(key, 8)

    def u(k, shape, fan_in):
        bound = 1.0 / math.sqrt(fan_in)
        return jax.random.uniform(k, shape, jnp.float32, -bound, bound)

    return {
        "in_proj_weight": u(ks[0], (3 * D_MODEL, D_MODEL), D_MODEL),
        "in_proj_bias": u(ks[1], (3 * D_MODEL,), D_MODEL),
        "out_proj_weight": u(ks[2], (D_MODEL, D_MODEL), D_MODEL),
        "out_proj_bias": u(ks[3], (D_MODEL,), D_MODEL),
        "linear1_weight": u(ks[4], (DIM_FF, D_MODEL), D_MODEL),
        "linear1_bias": u(ks[5], (DIM_FF,), D_MODEL),
        "linear2_weight": u(ks[6], (D_MODEL, DIM_FF), DIM_FF),
        "linear2_bias": u(ks[7], (D_MODEL,), DIM_FF),
        "norm1_weight": jnp.ones((D_MODEL,), jnp.float32),
        "norm1_bias": jnp.zeros((D_MODEL,), jnp.float32),
        "norm2_weight": jnp.ones((D_MODEL,), jnp.float32),
        "norm2_bias": jnp.zeros((D_MODEL,), jnp.float32),
    }


def pack_for_kernel(raw_layers):
    """Transpose weights to (in, out), fold 1/sqrt(HEAD_DIM) into the Q columns,
    pack the small params into one (8, 128) vreg per layer, stack along a layer
    axis, and cast MXU weights to bf16 (one-time host transform)."""
    scale = 1.0 / math.sqrt(HEAD_DIM)
    wqkv_l, wo_l, w1_l, w2_l, pv_l = [], [], [], [], []
    for p in raw_layers:
        wqkv = p["in_proj_weight"].T                          # (D, 3D)
        wqkv = wqkv.at[:, 0:D_MODEL].multiply(scale)          # fold scale into Q
        bqkv = p["in_proj_bias"].at[0:D_MODEL].multiply(scale)

        pv = jnp.zeros((PV_ROWS, PV_LANES), jnp.float32)
        pv = pv.at[0, 0:3 * D_MODEL].set(bqkv)
        pv = pv.at[1, 0:D_MODEL].set(p["out_proj_bias"])
        pv = pv.at[2, 0:DIM_FF].set(p["linear1_bias"])
        pv = pv.at[3, 0:D_MODEL].set(p["linear2_bias"])
        pv = pv.at[4, 0:D_MODEL].set(p["norm1_weight"])
        pv = pv.at[5, 0:D_MODEL].set(p["norm1_bias"])
        pv = pv.at[6, 0:D_MODEL].set(p["norm2_weight"])
        pv = pv.at[7, 0:D_MODEL].set(p["norm2_bias"])

        wqkv_l.append(wqkv)
        wo_l.append(p["out_proj_weight"].T)                   # (D, D)
        w1_l.append(p["linear1_weight"].T)                    # (D, FF)
        w2_l.append(p["linear2_weight"].T)                    # (FF, D)
        pv_l.append(pv)

    return {
        "wqkv": jnp.stack(wqkv_l).astype(MATMUL_DTYPE),
        "wo": jnp.stack(wo_l).astype(MATMUL_DTYPE),
        "w1": jnp.stack(w1_l).astype(MATMUL_DTYPE),
        "w2": jnp.stack(w2_l).astype(MATMUL_DTYPE),
        "pvec": jnp.stack(pv_l),                              # f32
    }


# ---------------- pure-JAX reference (for in-script validation) ----------------
def _layer_norm(x, g, b):
    mu = jnp.mean(x, axis=-1, keepdims=True)
    var = jnp.mean((x - mu) ** 2, axis=-1, keepdims=True)
    return (x - mu) * lax.rsqrt(var + EPS) * g + b


def reference_encoder(src, raw_layers, matmul_dtype=jnp.float32):
    """PyTorch-equivalent reference (post-norm, ReLU FFN, eval-mode dropout).
    `matmul_dtype` lets the reference emulate the kernel's bf16 MXU operand
    precision for a tight numerics check; f32 gives the exact reference."""
    S, B, D = src.shape
    x = src.astype(jnp.float32)
    scale = 1.0 / math.sqrt(HEAD_DIM)
    hidden = []

    def proj(a, w):   # a: (S, B, in), w: torch layout (out, in)
        return jnp.einsum("sbi,oi->sbo", a.astype(matmul_dtype),
                          w.astype(matmul_dtype),
                          preferred_element_type=jnp.float32)

    for p in raw_layers:
        qkv = proj(x, p["in_proj_weight"]) + p["in_proj_bias"]
        q = qkv[..., 0:D].reshape(S, B, NHEAD, HEAD_DIM) * scale
        k = qkv[..., D:2 * D].reshape(S, B, NHEAD, HEAD_DIM)
        v = qkv[..., 2 * D:].reshape(S, B, NHEAD, HEAD_DIM)
        scores = jnp.einsum("sbhd,tbhd->bhst", q, k,
                            preferred_element_type=jnp.float32)
        attn = jax.nn.softmax(scores, axis=-1)
        ctx = jnp.einsum("bhst,tbhd->sbhd", attn, v,
                         preferred_element_type=jnp.float32).reshape(S, B, D)
        a = proj(ctx, p["out_proj_weight"]) + p["out_proj_bias"]
        y = _layer_norm(x + a, p["norm1_weight"], p["norm1_bias"])
        h1 = jnp.maximum(proj(y, p["linear1_weight"]) + p["linear1_bias"], 0.0)
        f = proj(h1, p["linear2_weight"]) + p["linear2_bias"]
        x = _layer_norm(y + f, p["norm2_weight"], p["norm2_bias"])
        hidden.append(x)
    return x, hidden


if __name__ == "__main__":
    key = jax.random.PRNGKey(0)
    k_src, k_params = jax.random.split(key)

    src = jax.random.normal(k_src, (SEQ, BATCH, D_MODEL), jnp.float32)
    raw_layers = [init_layer_params(k) for k in jax.random.split(k_params, NUM_LAYERS)]
    kernel_params = pack_for_kernel(raw_layers)

    output, hidden_states = transformer_encoder_forward(src, kernel_params)
    output = jax.block_until_ready(output)
    for h in hidden_states:
        jax.block_until_ready(h)

    assert output.shape == (SEQ, BATCH, D_MODEL)
    assert len(hidden_states) == NUM_LAYERS
    assert all(h.shape == (SEQ, BATCH, D_MODEL) for h in hidden_states)

    # Tight check vs a reference that emulates the kernel's bf16 MXU operand
    # precision (remaining delta: approx EUP reciprocal + reduction order).
    ref_out_bf16, ref_hid_bf16 = reference_encoder(src, raw_layers,
                                                   matmul_dtype=MATMUL_DTYPE)
    err_out = float(jnp.max(jnp.abs(output - ref_out_bf16)))
    err_h0 = float(jnp.max(jnp.abs(hidden_states[0] - ref_hid_bf16[0])))
    assert err_out < 2e-2, f"output mismatch vs bf16-emulating reference: {err_out}"
    assert err_h0 < 2e-2, f"hidden_states[0] mismatch vs reference: {err_h0}"

    # Loose sanity check vs the exact-f32 (PyTorch-equivalent) reference; the only
    # deviation is the intentional bf16 MXU operand cast (perf review, v6e/v7x).
    ref_out_f32, _ = reference_encoder(src, raw_layers, matmul_dtype=jnp.float32)
    err_f32 = float(jnp.max(jnp.abs(output - ref_out_f32)))
    assert err_f32 < 0.25, f"output drifted too far from f32 reference: {err_f32}"

    print("KERNEL_OK")
</pallas_src>

<mosaic_0001>
module attributes {stable_mosaic.version = 11 : i64} {
  func.func @_fused_encoder_kernel(%arg0: i32, %arg1: memref<1x8x32xf32, #tpu.memory_space<vmem>>, %arg2: memref<2x32x96xbf16, #tpu.memory_space<vmem>>, %arg3: memref<2x32x32xbf16, #tpu.memory_space<vmem>>, %arg4: memref<2x32x64xbf16, #tpu.memory_space<vmem>>, %arg5: memref<2x64x32xbf16, #tpu.memory_space<vmem>>, %arg6: memref<2x8x128xf32, #tpu.memory_space<vmem>>, %arg7: memref<1x2x8x32xf32, #tpu.memory_space<vmem>>) attributes {dimension_semantics = [#tpu.dimension_semantics<parallel>], iteration_bounds = array<i64: 2>, scalar_prefetch = 0 : i64, scratch_operands = 0 : i64, tpu.core_type = #tpu.core_type<tc>, window_params = [{transform_indices = @transform_0, window_bounds = array<i64: 1, 8, 32>}, {pipeline_mode = #tpu.pipeline_mode<synchronous>, transform_indices = @transform_1, window_bounds = array<i64: 2, 32, 96>}, {pipeline_mode = #tpu.pipeline_mode<synchronous>, transform_indices = @transform_2, window_bounds = array<i64: 2, 32, 32>}, {pipeline_mode = #tpu.pipeline_mode<synchronous>, transform_indices = @transform_3, window_bounds = array<i64: 2, 32, 64>}, {pipeline_mode = #tpu.pipeline_mode<synchronous>, transform_indices = @transform_4, window_bounds = array<i64: 2, 64, 32>}, {pipeline_mode = #tpu.pipeline_mode<synchronous>, transform_indices = @transform_5, window_bounds = array<i64: 2, 8, 128>}, {transform_indices = @transform_6, window_bounds = array<i64: 1, 2, 8, 32>}]} {
    %c0 = arith.constant 0 : index
    %c0_0 = arith.constant 0 : index
    %c0_1 = arith.constant 0 : index
    %0 = vector.load %arg1[%c0, %c0_0, %c0_1] : memref<1x8x32xf32, #tpu.memory_space<vmem>>, vector<1x8x32xf32>
    %1 = vector.shape_cast %0 : vector<1x8x32xf32> to vector<8x32xf32>
    %c0_2 = arith.constant 0 : index
    %c0_3 = arith.constant 0 : index
    %c0_4 = arith.constant 0 : index
    %2 = vector.load %arg2[%c0_2, %c0_3, %c0_4] : memref<2x32x96xbf16, #tpu.memory_space<vmem>>, vector<1x32x96xbf16>
    %3 = vector.shape_cast %2 : vector<1x32x96xbf16> to vector<32x96xbf16>
    %c0_5 = arith.constant 0 : index
    %c0_6 = arith.constant 0 : index
    %c0_7 = arith.constant 0 : index
    %4 = vector.load %arg3[%c0_5, %c0_6, %c0_7] : memref<2x32x32xbf16, #tpu.memory_space<vmem>>, vector<1x32x32xbf16>
    %5 = vector.shape_cast %4 : vector<1x32x32xbf16> to vector<32x32xbf16>
    %c0_8 = arith.constant 0 : index
    %c0_9 = arith.constant 0 : index
    %c0_10 = arith.constant 0 : index
    %6 = vector.load %arg4[%c0_8, %c0_9, %c0_10] : memref<2x32x64xbf16, #tpu.memory_space<vmem>>, vector<1x32x64xbf16>
    %7 = vector.shape_cast %6 : vector<1x32x64xbf16> to vector<32x64xbf16>
    %c0_11 = arith.constant 0 : index
    %c0_12 = arith.constant 0 : index
    %c0_13 = arith.constant 0 : index
    %8 = vector.load %arg5[%c0_11, %c0_12, %c0_13] : memref<2x64x32xbf16, #tpu.memory_space<vmem>>, vector<1x64x32xbf16>
    %9 = vector.shape_cast %8 : vector<1x64x32xbf16> to vector<64x32xbf16>
    %c0_14 = arith.constant 0 : index
    %c0_15 = arith.constant 0 : index
    %c0_16 = arith.constant 0 : index
    %10 = vector.load %arg6[%c0_14, %c0_15, %c0_16] : memref<2x8x128xf32, #tpu.memory_space<vmem>>, vector<1x8x128xf32>
    %11 = vector.shape_cast %10 : vector<1x8x128xf32> to vector<8x128xf32>
    %12 = vector.extract_strided_slice %11 {offsets = [0, 0], sizes = [1, 96], strides = [1, 1]} : vector<8x128xf32> to vector<1x96xf32>
    %13 = vector.extract_strided_slice %11 {offsets = [1, 0], sizes = [1, 32], strides = [1, 1]} : vector<8x128xf32> to vector<1x32xf32>
    %14 = vector.extract_strided_slice %11 {offsets = [2, 0], sizes = [1, 64], strides = [1, 1]} : vector<8x128xf32> to vector<1x64xf32>
    %15 = vector.extract_strided_slice %11 {offsets = [3, 0], sizes = [1, 32], strides = [1, 1]} : vector<8x128xf32> to vector<1x32xf32>
    %16 = vector.extract_strided_slice %11 {offsets = [4, 0], sizes = [1, 32], strides = [1, 1]} : vector<8x128xf32> to vector<1x32xf32>
    %17 = vector.extract_strided_slice %11 {offsets = [5, 0], sizes = [1, 32], strides = [1, 1]} : vector<8x128xf32> to vector<1x32xf32>
    %18 = vector.extract_strided_slice %11 {offsets = [6, 0], sizes = [1, 32], strides = [1, 1]} : vector<8x128xf32> to vector<1x32xf32>
    %19 = vector.extract_strided_slice %11 {offsets = [7, 0], sizes = [1, 32], strides = [1, 1]} : vector<8x128xf32> to vector<1x32xf32>
    %20 = arith.truncf %1 : vector<8x32xf32> to vector<8x32xbf16>
    %cst = arith.constant dense<0.000000e+00> : vector<8x96xf32>
    %21 = tpu.matmul %20, %3, %cst {dimension_numbers = #tpu.dot_dimension_numbers<[1], [0], [0], [1], [0, 0, 1, 1], [], []>} : vector<8x32xbf16>, vector<32x96xbf16>, vector<8x96xf32> -> vector<8x96xf32>
    %22 = vector.broadcast %12 : vector<1x96xf32> to vector<8x96xf32>
    %23 = arith.addf %21, %22 : vector<8x96xf32>
    %24 = vector.extract_strided_slice %23 {offsets = [0, 0], sizes = [8, 8], strides = [1, 1]} : vector<8x96xf32> to vector<8x8xf32>
    %25 = vector.extract_strided_slice %23 {offsets = [0, 8], sizes = [8, 8], strides = [1, 1]} : vector<8x96xf32> to vector<8x8xf32>
    %26 = vector.extract_strided_slice %23 {offsets = [0, 16], sizes = [8, 8], strides = [1, 1]} : vector<8x96xf32> to vector<8x8xf32>
    %27 = vector.extract_strided_slice %23 {offsets = [0, 24], sizes = [8, 8], strides = [1, 1]} : vector<8x96xf32> to vector<8x8xf32>
    %28 = vector.shape_cast %24 : vector<8x8xf32> to vector<1x8x8xf32>
    %29 = vector.shape_cast %25 : vector<8x8xf32> to vector<1x8x8xf32>
    %30 = vector.shape_cast %26 : vector<8x8xf32> to vector<1x8x8xf32>
    %31 = vector.shape_cast %27 : vector<8x8xf32> to vector<1x8x8xf32>
    %32 = tpu.concatenate %28, %29, %30, %31 in 0 : vector<1x8x8xf32>, vector<1x8x8xf32>, vector<1x8x8xf32>, vector<1x8x8xf32> -> vector<4x8x8xf32>
    %33 = vector.extract_strided_slice %23 {offsets = [0, 32], sizes = [8, 8], strides = [1, 1]} : vector<8x96xf32> to vector<8x8xf32>
    %34 = vector.extract_strided_slice %23 {offsets = [0, 40], sizes = [8, 8], strides = [1, 1]} : vector<8x96xf32> to vector<8x8xf32>
    %35 = vector.extract_strided_slice %23 {offsets = [0, 48], sizes = [8, 8], strides = [1, 1]} : vector<8x96xf32> to vector<8x8xf32>
    %36 = vector.extract_strided_slice %23 {offsets = [0, 56], sizes = [8, 8], strides = [1, 1]} : vector<8x96xf32> to vector<8x8xf32>
    %37 = vector.shape_cast %33 : vector<8x8xf32> to vector<1x8x8xf32>
    %38 = vector.shape_cast %34 : vector<8x8xf32> to vector<1x8x8xf32>
    %39 = vector.shape_cast %35 : vector<8x8xf32> to vector<1x8x8xf32>
    %40 = vector.shape_cast %36 : vector<8x8xf32> to vector<1x8x8xf32>
    %41 = tpu.concatenate %37, %38, %39, %40 in 0 : vector<1x8x8xf32>, vector<1x8x8xf32>, vector<1x8x8xf32>, vector<1x8x8xf32> -> vector<4x8x8xf32>
    %42 = vector.extract_strided_slice %23 {offsets = [0, 64], sizes = [8, 8], strides = [1, 1]} : vector<8x96xf32> to vector<8x8xf32>
    %43 = vector.extract_strided_slice %23 {offsets = [0, 72], sizes = [8, 8], strides = [1, 1]} : vector<8x96xf32> to vector<8x8xf32>
    %44 = vector.extract_strided_slice %23 {offsets = [0, 80], sizes = [8, 8], strides = [1, 1]} : vector<8x96xf32> to vector<8x8xf32>
    %45 = vector.extract_strided_slice %23 {offsets = [0, 88], sizes = [8, 8], strides = [1, 1]} : vector<8x96xf32> to vector<8x8xf32>
    %46 = vector.shape_cast %42 : vector<8x8xf32> to vector<1x8x8xf32>
    %47 = vector.shape_cast %43 : vector<8x8xf32> to vector<1x8x8xf32>
    %48 = vector.shape_cast %44 : vector<8x8xf32> to vector<1x8x8xf32>
    %49 = vector.shape_cast %45 : vector<8x8xf32> to vector<1x8x8xf32>
    %50 = tpu.concatenate %46, %47, %48, %49 in 0 : vector<1x8x8xf32>, vector<1x8x8xf32>, vector<1x8x8xf32>, vector<1x8x8xf32> -> vector<4x8x8xf32>
    "tpu.trace_start"() <{level = 10 : i32, message = "hqd,hkd->hqk"}> : () -> ()
    %cst_17 = arith.constant dense<0.000000e+00> : vector<4x8x8xf32>
    %51 = tpu.matmul %32, %41, %cst_17 {dimension_numbers = #tpu.dot_dimension_numbers<[2], [2], [1], [1], [0, 0, 0, 1, 1, 1], [0], [0]>} : vector<4x8x8xf32>, vector<4x8x8xf32>, vector<4x8x8xf32> -> vector<4x8x8xf32>
    "tpu.trace_stop"() : () -> ()
    %cst_18 = arith.constant dense<0xFF800000> : vector<4x8xf32>
    %52 = vector.multi_reduction <maximumf>, %51, %cst_18 [2] : vector<4x8x8xf32> to vector<4x8xf32>
    %53 = vector.shape_cast %52 : vector<4x8xf32> to vector<4x8x1xf32>
    %54 = vector.broadcast %53 : vector<4x8x1xf32> to vector<4x8x8xf32>
    %55 = arith.subf %51, %54 : vector<4x8x8xf32>
    %56 = math.exp %55 : vector<4x8x8xf32>
    %cst_19 = arith.constant dense<0.000000e+00> : vector<4x8xf32>
    %57 = vector.multi_reduction <add>, %56, %cst_19 [2] : vector<4x8x8xf32> to vector<4x8xf32>
    %58 = vector.shape_cast %57 : vector<4x8xf32> to vector<4x8x1xf32>
    %59 = tpu.reciprocal %58 {approx = true} : vector<4x8x1xf32> -> vector<4x8x1xf32>
    %60 = vector.broadcast %59 : vector<4x8x1xf32> to vector<4x8x8xf32>
    %61 = arith.mulf %56, %60 : vector<4x8x8xf32>
    "tpu.trace_start"() <{level = 10 : i32, message = "hqk,hkd->hqd"}> : () -> ()
    %cst_20 = arith.constant dense<0.000000e+00> : vector<4x8x8xf32>
    %62 = tpu.matmul %61, %50, %cst_20 {dimension_numbers = #tpu.dot_dimension_numbers<[2], [1], [1], [2], [0, 0, 0, 1, 1, 2], [0], [0]>} : vector<4x8x8xf32>, vector<4x8x8xf32>, vector<4x8x8xf32> -> vector<4x8x8xf32>
    "tpu.trace_stop"() : () -> ()
    %63 = vector.extract_strided_slice %62 {offsets = [0, 0, 0], sizes = [1, 8, 8], strides = [1, 1, 1]} : vector<4x8x8xf32> to vector<1x8x8xf32>
    %64 = vector.shape_cast %63 : vector<1x8x8xf32> to vector<8x8xf32>
    %65 = vector.extract_strided_slice %62 {offsets = [1, 0, 0], sizes = [1, 8, 8], strides = [1, 1, 1]} : vector<4x8x8xf32> to vector<1x8x8xf32>
    %66 = vector.shape_cast %65 : vector<1x8x8xf32> to vector<8x8xf32>
    %67 = vector.extract_strided_slice %62 {offsets = [2, 0, 0], sizes = [1, 8, 8], strides = [1, 1, 1]} : vector<4x8x8xf32> to vector<1x8x8xf32>
    %68 = vector.shape_cast %67 : vector<1x8x8xf32> to vector<8x8xf32>
    %69 = vector.extract_strided_slice %62 {offsets = [3, 0, 0], sizes = [1, 8, 8], strides = [1, 1, 1]} : vector<4x8x8xf32> to vector<1x8x8xf32>
    %70 = vector.shape_cast %69 : vector<1x8x8xf32> to vector<8x8xf32>
    %71 = tpu.concatenate %64, %66, %68, %70 in 1 : vector<8x8xf32>, vector<8x8xf32>, vector<8x8xf32>, vector<8x8xf32> -> vector<8x32xf32>
    %72 = arith.truncf %71 : vector<8x32xf32> to vector<8x32xbf16>
    %cst_21 = arith.constant dense<0.000000e+00> : vector<8x32xf32>
    %73 = tpu.matmul %72, %5, %cst_21 {dimension_numbers = #tpu.dot_dimension_numbers<[1], [0], [0], [1], [0, 0, 1, 1], [], []>} : vector<8x32xbf16>, vector<32x32xbf16>, vector<8x32xf32> -> vector<8x32xf32>
    %74 = vector.broadcast %13 : vector<1x32xf32> to vector<8x32xf32>
    %75 = arith.addf %73, %74 : vector<8x32xf32>
    %76 = arith.addf %1, %75 : vector<8x32xf32>
    %cst_22 = arith.constant dense<0.000000e+00> : vector<8xf32>
    %77 = vector.multi_reduction <add>, %76, %cst_22 [1] : vector<8x32xf32> to vector<8xf32>
    %78 = vector.shape_cast %77 : vector<8xf32> to vector<8x1xf32>
    %cst_23 = arith.constant 3.200000e+01 : f32
    %79 = vector.broadcast %cst_23 : f32 to vector<8x1xf32>
    %80 = arith.divf %78, %79 : vector<8x1xf32>
    %81 = vector.broadcast %80 : vector<8x1xf32> to vector<8x32xf32>
    %82 = arith.subf %76, %81 : vector<8x32xf32>
    %83 = arith.mulf %82, %82 : vector<8x32xf32>
    %cst_24 = arith.constant dense<0.000000e+00> : vector<8xf32>
    %84 = vector.multi_reduction <add>, %83, %cst_24 [1] : vector<8x32xf32> to vector<8xf32>
    %85 = vector.shape_cast %84 : vector<8xf32> to vector<8x1xf32>
    %cst_25 = arith.constant 3.200000e+01 : f32
    %86 = vector.broadcast %cst_25 : f32 to vector<8x1xf32>
    %87 = arith.divf %85, %86 : vector<8x1xf32>
    %88 = vector.broadcast %80 : vector<8x1xf32> to vector<8x32xf32>
    %89 = arith.subf %76, %88 : vector<8x32xf32>
    %cst_26 = arith.constant 9.99999974E-6 : f32
    %90 = vector.broadcast %cst_26 : f32 to vector<8x1xf32>
    %91 = arith.addf %87, %90 : vector<8x1xf32>
    %92 = math.rsqrt %91 : vector<8x1xf32>
    %93 = vector.broadcast %92 : vector<8x1xf32> to vector<8x32xf32>
    %94 = arith.mulf %89, %93 : vector<8x32xf32>
    %95 = vector.broadcast %16 : vector<1x32xf32> to vector<8x32xf32>
    %96 = arith.mulf %94, %95 : vector<8x32xf32>
    %97 = vector.broadcast %17 : vector<1x32xf32> to vector<8x32xf32>
    %98 = arith.addf %96, %97 : vector<8x32xf32>
    %99 = arith.truncf %98 : vector<8x32xf32> to vector<8x32xbf16>
    %cst_27 = arith.constant dense<0.000000e+00> : vector<8x64xf32>
    %100 = tpu.matmul %99, %7, %cst_27 {dimension_numbers = #tpu.dot_dimension_numbers<[1], [0], [0], [1], [0, 0, 1, 1], [], []>} : vector<8x32xbf16>, vector<32x64xbf16>, vector<8x64xf32> -> vector<8x64xf32>
    %101 = vector.broadcast %14 : vector<1x64xf32> to vector<8x64xf32>
    %102 = arith.addf %100, %101 : vector<8x64xf32>
    %cst_28 = arith.constant 0.000000e+00 : f32
    %103 = vector.broadcast %cst_28 : f32 to vector<8x64xf32>
    %104 = arith.maximumf %102, %103 : vector<8x64xf32>
    %105 = arith.truncf %104 : vector<8x64xf32> to vector<8x64xbf16>
    %cst_29 = arith.constant dense<0.000000e+00> : vector<8x32xf32>
    %106 = tpu.matmul %105, %9, %cst_29 {dimension_numbers = #tpu.dot_dimension_numbers<[1], [0], [0], [1], [0, 0, 1, 1], [], []>} : vector<8x64xbf16>, vector<64x32xbf16>, vector<8x32xf32> -> vector<8x32xf32>
    %107 = vector.broadcast %15 : vector<1x32xf32> to vector<8x32xf32>
    %108 = arith.addf %106, %107 : vector<8x32xf32>
    %109 = arith.addf %98, %108 : vector<8x32xf32>
    %cst_30 = arith.constant dense<0.000000e+00> : vector<8xf32>
    %110 = vector.multi_reduction <add>, %109, %cst_30 [1] : vector<8x32xf32> to vector<8xf32>
    %111 = vector.shape_cast %110 : vector<8xf32> to vector<8x1xf32>
    %cst_31 = arith.constant 3.200000e+01 : f32
    %112 = vector.broadcast %cst_31 : f32 to vector<8x1xf32>
    %113 = arith.divf %111, %112 : vector<8x1xf32>
    %114 = vector.broadcast %113 : vector<8x1xf32> to vector<8x32xf32>
    %115 = arith.subf %109, %114 : vector<8x32xf32>
    %116 = arith.mulf %115, %115 : vector<8x32xf32>
    %cst_32 = arith.constant dense<0.000000e+00> : vector<8xf32>
    %117 = vector.multi_reduction <add>, %116, %cst_32 [1] : vector<8x32xf32> to vector<8xf32>
    %118 = vector.shape_cast %117 : vector<8xf32> to vector<8x1xf32>
    %cst_33 = arith.constant 3.200000e+01 : f32
    %119 = vector.broadcast %cst_33 : f32 to vector<8x1xf32>
    %120 = arith.divf %118, %119 : vector<8x1xf32>
    %121 = vector.broadcast %113 : vector<8x1xf32> to vector<8x32xf32>
    %122 = arith.subf %109, %121 : vector<8x32xf32>
    %cst_34 = arith.constant 9.99999974E-6 : f32
    %123 = vector.broadcast %cst_34 : f32 to vector<8x1xf32>
    %124 = arith.addf %120, %123 : vector<8x1xf32>
    %125 = math.rsqrt %124 : vector<8x1xf32>
    %126 = vector.broadcast %125 : vector<8x1xf32> to vector<8x32xf32>
    %127 = arith.mulf %122, %126 : vector<8x32xf32>
    %128 = vector.broadcast %18 : vector<1x32xf32> to vector<8x32xf32>
    %129 = arith.mulf %127, %128 : vector<8x32xf32>
    %130 = vector.broadcast %19 : vector<1x32xf32> to vector<8x32xf32>
    %131 = arith.addf %129, %130 : vector<8x32xf32>
    %c0_35 = arith.constant 0 : index
    %c0_36 = arith.constant 0 : index
    %c0_37 = arith.constant 0 : index
    %c0_38 = arith.constant 0 : index
    %132 = vector.load %arg7[%c0_35, %c0_36, %c0_37, %c0_38] : memref<1x2x8x32xf32, #tpu.memory_space<vmem>>, vector<1x1x8x32xf32>
    %133 = vector.shape_cast %132 : vector<1x1x8x32xf32> to vector<8x32xf32>
    %134 = vector.shape_cast %131 : vector<8x32xf32> to vector<1x1x8x32xf32>
    tpu.vector_store %arg7[%c0_35, %c0_36, %c0_37, %c0_38], %134 {strides = array<i32>} : memref<1x2x8x32xf32, #tpu.memory_space<vmem>>, vector<1x1x8x32xf32>,
    %c1 = arith.constant 1 : index
    %c0_39 = arith.constant 0 : index
    %c0_40 = arith.constant 0 : index
    %135 = vector.load %arg2[%c1, %c0_39, %c0_40] : memref<2x32x96xbf16, #tpu.memory_space<vmem>>, vector<1x32x96xbf16>
    %136 = vector.shape_cast %135 : vector<1x32x96xbf16> to vector<32x96xbf16>
    %c1_41 = arith.constant 1 : index
    %c0_42 = arith.constant 0 : index
    %c0_43 = arith.constant 0 : index
    %137 = vector.load %arg3[%c1_41, %c0_42, %c0_43] : memref<2x32x32xbf16, #tpu.memory_space<vmem>>, vector<1x32x32xbf16>
    %138 = vector.shape_cast %137 : vector<1x32x32xbf16> to vector<32x32xbf16>
    %c1_44 = arith.constant 1 : index
    %c0_45 = arith.constant 0 : index
    %c0_46 = arith.constant 0 : index
    %139 = vector.load %arg4[%c1_44, %c0_45, %c0_46] : memref<2x32x64xbf16, #tpu.memory_space<vmem>>, vector<1x32x64xbf16>
    %140 = vector.shape_cast %139 : vector<1x32x64xbf16> to vector<32x64xbf16>
    %c1_47 = arith.constant 1 : index
    %c0_48 = arith.constant 0 : index
    %c0_49 = arith.constant 0 : index
    %141 = vector.load %arg5[%c1_47, %c0_48, %c0_49] : memref<2x64x32xbf16, #tpu.memory_space<vmem>>, vector<1x64x32xbf16>
    %142 = vector.shape_cast %141 : vector<1x64x32xbf16> to vector<64x32xbf16>
    %c1_50 = arith.constant 1 : index
    %c0_51 = arith.constant 0 : index
    %c0_52 = arith.constant 0 : index
    %143 = vector.load %arg6[%c1_50, %c0_51, %c0_52] : memref<2x8x128xf32, #tpu.memory_space<vmem>>, vector<1x8x128xf32>
    %144 = vector.shape_cast %143 : vector<1x8x128xf32> to vector<8x128xf32>
    %145 = vector.extract_strided_slice %144 {offsets = [0, 0], sizes = [1, 96], strides = [1, 1]} : vector<8x128xf32> to vector<1x96xf32>
    %146 = vector.extract_strided_slice %144 {offsets = [1, 0], sizes = [1, 32], strides = [1, 1]} : vector<8x128xf32> to vector<1x32xf32>
    %147 = vector.extract_strided_slice %144 {offsets = [2, 0], sizes = [1, 64], strides = [1, 1]} : vector<8x128xf32> to vector<1x64xf32>
    %148 = vector.extract_strided_slice %144 {offsets = [3, 0], sizes = [1, 32], strides = [1, 1]} : vector<8x128xf32> to vector<1x32xf32>
    %149 = vector.extract_strided_slice %144 {offsets = [4, 0], sizes = [1, 32], strides = [1, 1]} : vector<8x128xf32> to vector<1x32xf32>
    %150 = vector.extract_strided_slice %144 {offsets = [5, 0], sizes = [1, 32], strides = [1, 1]} : vector<8x128xf32> to vector<1x32xf32>
    %151 = vector.extract_strided_slice %144 {offsets = [6, 0], sizes = [1, 32], strides = [1, 1]} : vector<8x128xf32> to vector<1x32xf32>
    %152 = vector.extract_strided_slice %144 {offsets = [7, 0], sizes = [1, 32], strides = [1, 1]} : vector<8x128xf32> to vector<1x32xf32>
    %153 = arith.truncf %131 : vector<8x32xf32> to vector<8x32xbf16>
    %cst_53 = arith.constant dense<0.000000e+00> : vector<8x96xf32>
    %154 = tpu.matmul %153, %136, %cst_53 {dimension_numbers = #tpu.dot_dimension_numbers<[1], [0], [0], [1], [0, 0, 1, 1], [], []>} : vector<8x32xbf16>, vector<32x96xbf16>, vector<8x96xf32> -> vector<8x96xf32>
    %155 = vector.broadcast %145 : vector<1x96xf32> to vector<8x96xf32>
    %156 = arith.addf %154, %155 : vector<8x96xf32>
    %157 = vector.extract_strided_slice %156 {offsets = [0, 0], sizes = [8, 8], strides = [1, 1]} : vector<8x96xf32> to vector<8x8xf32>
    %158 = vector.extract_strided_slice %156 {offsets = [0, 8], sizes = [8, 8], strides = [1, 1]} : vector<8x96xf32> to vector<8x8xf32>
    %159 = vector.extract_strided_slice %156 {offsets = [0, 16], sizes = [8, 8], strides = [1, 1]} : vector<8x96xf32> to vector<8x8xf32>
    %160 = vector.extract_strided_slice %156 {offsets = [0, 24], sizes = [8, 8], strides = [1, 1]} : vector<8x96xf32> to vector<8x8xf32>
    %161 = vector.shape_cast %157 : vector<8x8xf32> to vector<1x8x8xf32>
    %162 = vector.shape_cast %158 : vector<8x8xf32> to vector<1x8x8xf32>
    %163 = vector.shape_cast %159 : vector<8x8xf32> to vector<1x8x8xf32>
    %164 = vector.shape_cast %160 : vector<8x8xf32> to vector<1x8x8xf32>
    %165 = tpu.concatenate %161, %162, %163, %164 in 0 : vector<1x8x8xf32>, vector<1x8x8xf32>, vector<1x8x8xf32>, vector<1x8x8xf32> -> vector<4x8x8xf32>
    %166 = vector.extract_strided_slice %156 {offsets = [0, 32], sizes = [8, 8], strides = [1, 1]} : vector<8x96xf32> to vector<8x8xf32>
    %167 = vector.extract_strided_slice %156 {offsets = [0, 40], sizes = [8, 8], strides = [1, 1]} : vector<8x96xf32> to vector<8x8xf32>
    %168 = vector.extract_strided_slice %156 {offsets = [0, 48], sizes = [8, 8], strides = [1, 1]} : vector<8x96xf32> to vector<8x8xf32>
    %169 = vector.extract_strided_slice %156 {offsets = [0, 56], sizes = [8, 8], strides = [1, 1]} : vector<8x96xf32> to vector<8x8xf32>
    %170 = vector.shape_cast %166 : vector<8x8xf32> to vector<1x8x8xf32>
    %171 = vector.shape_cast %167 : vector<8x8xf32> to vector<1x8x8xf32>
    %172 = vector.shape_cast %168 : vector<8x8xf32> to vector<1x8x8xf32>
    %173 = vector.shape_cast %169 : vector<8x8xf32> to vector<1x8x8xf32>
    %174 = tpu.concatenate %170, %171, %172, %173 in 0 : vector<1x8x8xf32>, vector<1x8x8xf32>, vector<1x8x8xf32>, vector<1x8x8xf32> -> vector<4x8x8xf32>
    %175 = vector.extract_strided_slice %156 {offsets = [0, 64], sizes = [8, 8], strides = [1, 1]} : vector<8x96xf32> to vector<8x8xf32>
    %176 = vector.extract_strided_slice %156 {offsets = [0, 72], sizes = [8, 8], strides = [1, 1]} : vector<8x96xf32> to vector<8x8xf32>
    %177 = vector.extract_strided_slice %156 {offsets = [0, 80], sizes = [8, 8], strides = [1, 1]} : vector<8x96xf32> to vector<8x8xf32>
    %178 = vector.extract_strided_slice %156 {offsets = [0, 88], sizes = [8, 8], strides = [1, 1]} : vector<8x96xf32> to vector<8x8xf32>
    %179 = vector.shape_cast %175 : vector<8x8xf32> to vector<1x8x8xf32>
    %180 = vector.shape_cast %176 : vector<8x8xf32> to vector<1x8x8xf32>
    %181 = vector.shape_cast %177 : vector<8x8xf32> to vector<1x8x8xf32>
    %182 = vector.shape_cast %178 : vector<8x8xf32> to vector<1x8x8xf32>
    %183 = tpu.concatenate %179, %180, %181, %182 in 0 : vector<1x8x8xf32>, vector<1x8x8xf32>, vector<1x8x8xf32>, vector<1x8x8xf32> -> vector<4x8x8xf32>
    "tpu.trace_start"() <{level = 10 : i32, message = "hqd,hkd->hqk"}> : () -> ()
    %cst_54 = arith.constant dense<0.000000e+00> : vector<4x8x8xf32>
    %184 = tpu.matmul %165, %174, %cst_54 {dimension_numbers = #tpu.dot_dimension_numbers<[2], [2], [1], [1], [0, 0, 0, 1, 1, 1], [0], [0]>} : vector<4x8x8xf32>, vector<4x8x8xf32>, vector<4x8x8xf32> -> vector<4x8x8xf32>
    "tpu.trace_stop"() : () -> ()
    %cst_55 = arith.constant dense<0xFF800000> : vector<4x8xf32>
    %185 = vector.multi_reduction <maximumf>, %184, %cst_55 [2] : vector<4x8x8xf32> to vector<4x8xf32>
    %186 = vector.shape_cast %185 : vector<4x8xf32> to vector<4x8x1xf32>
    %187 = vector.broadcast %186 : vector<4x8x1xf32> to vector<4x8x8xf32>
    %188 = arith.subf %184, %187 : vector<4x8x8xf32>
    %189 = math.exp %188 : vector<4x8x8xf32>
    %cst_56 = arith.constant dense<0.000000e+00> : vector<4x8xf32>
    %190 = vector.multi_reduction <add>, %189, %cst_56 [2] : vector<4x8x8xf32> to vector<4x8xf32>
    %191 = vector.shape_cast %190 : vector<4x8xf32> to vector<4x8x1xf32>
    %192 = tpu.reciprocal %191 {approx = true} : vector<4x8x1xf32> -> vector<4x8x1xf32>
    %193 = vector.broadcast %192 : vector<4x8x1xf32> to vector<4x8x8xf32>
    %194 = arith.mulf %189, %193 : vector<4x8x8xf32>
    "tpu.trace_start"() <{level = 10 : i32, message = "hqk,hkd->hqd"}> : () -> ()
    %cst_57 = arith.constant dense<0.000000e+00> : vector<4x8x8xf32>
    %195 = tpu.matmul %194, %183, %cst_57 {dimension_numbers = #tpu.dot_dimension_numbers<[2], [1], [1], [2], [0, 0, 0, 1, 1, 2], [0], [0]>} : vector<4x8x8xf32>, vector<4x8x8xf32>, vector<4x8x8xf32> -> vector<4x8x8xf32>
    "tpu.trace_stop"() : () -> ()
    %196 = vector.extract_strided_slice %195 {offsets = [0, 0, 0], sizes = [1, 8, 8], strides = [1, 1, 1]} : vector<4x8x8xf32> to vector<1x8x8xf32>
    %197 = vector.shape_cast %196 : vector<1x8x8xf32> to vector<8x8xf32>
    %198 = vector.extract_strided_slice %195 {offsets = [1, 0, 0], sizes = [1, 8, 8], strides = [1, 1, 1]} : vector<4x8x8xf32> to vector<1x8x8xf32>
    %199 = vector.shape_cast %198 : vector<1x8x8xf32> to vector<8x8xf32>
    %200 = vector.extract_strided_slice %195 {offsets = [2, 0, 0], sizes = [1, 8, 8], strides = [1, 1, 1]} : vector<4x8x8xf32> to vector<1x8x8xf32>
    %201 = vector.shape_cast %200 : vector<1x8x8xf32> to vector<8x8xf32>
    %202 = vector.extract_strided_slice %195 {offsets = [3, 0, 0], sizes = [1, 8, 8], strides = [1, 1, 1]} : vector<4x8x8xf32> to vector<1x8x8xf32>
    %203 = vector.shape_cast %202 : vector<1x8x8xf32> to vector<8x8xf32>
    %204 = tpu.concatenate %197, %199, %201, %203 in 1 : vector<8x8xf32>, vector<8x8xf32>, vector<8x8xf32>, vector<8x8xf32> -> vector<8x32xf32>
    %205 = arith.truncf %204 : vector<8x32xf32> to vector<8x32xbf16>
    %cst_58 = arith.constant dense<0.000000e+00> : vector<8x32xf32>
    %206 = tpu.matmul %205, %138, %cst_58 {dimension_numbers = #tpu.dot_dimension_numbers<[1], [0], [0], [1], [0, 0, 1, 1], [], []>} : vector<8x32xbf16>, vector<32x32xbf16>, vector<8x32xf32> -> vector<8x32xf32>
    %207 = vector.broadcast %146 : vector<1x32xf32> to vector<8x32xf32>
    %208 = arith.addf %206, %207 : vector<8x32xf32>
    %209 = arith.addf %131, %208 : vector<8x32xf32>
    %cst_59 = arith.constant dense<0.000000e+00> : vector<8xf32>
    %210 = vector.multi_reduction <add>, %209, %cst_59 [1] : vector<8x32xf32> to vector<8xf32>
    %211 = vector.shape_cast %210 : vector<8xf32> to vector<8x1xf32>
    %cst_60 = arith.constant 3.200000e+01 : f32
    %212 = vector.broadcast %cst_60 : f32 to vector<8x1xf32>
    %213 = arith.divf %211, %212 : vector<8x1xf32>
    %214 = vector.broadcast %213 : vector<8x1xf32> to vector<8x32xf32>
    %215 = arith.subf %209, %214 : vector<8x32xf32>
    %216 = arith.mulf %215, %215 : vector<8x32xf32>
    %cst_61 = arith.constant dense<0.000000e+00> : vector<8xf32>
    %217 = vector.multi_reduction <add>, %216, %cst_61 [1] : vector<8x32xf32> to vector<8xf32>
    %218 = vector.shape_cast %217 : vector<8xf32> to vector<8x1xf32>
    %cst_62 = arith.constant 3.200000e+01 : f32
    %219 = vector.broadcast %cst_62 : f32 to vector<8x1xf32>
    %220 = arith.divf %218, %219 : vector<8x1xf32>
    %221 = vector.broadcast %213 : vector<8x1xf32> to vector<8x32xf32>
    %222 = arith.subf %209, %221 : vector<8x32xf32>
    %cst_63 = arith.constant 9.99999974E-6 : f32
    %223 = vector.broadcast %cst_63 : f32 to vector<8x1xf32>
    %224 = arith.addf %220, %223 : vector<8x1xf32>
    %225 = math.rsqrt %224 : vector<8x1xf32>
    %226 = vector.broadcast %225 : vector<8x1xf32> to vector<8x32xf32>
    %227 = arith.mulf %222, %226 : vector<8x32xf32>
    %228 = vector.broadcast %149 : vector<1x32xf32> to vector<8x32xf32>
    %229 = arith.mulf %227, %228 : vector<8x32xf32>
    %230 = vector.broadcast %150 : vector<1x32xf32> to vector<8x32xf32>
    %231 = arith.addf %229, %230 : vector<8x32xf32>
    %232 = arith.truncf %231 : vector<8x32xf32> to vector<8x32xbf16>
    %cst_64 = arith.constant dense<0.000000e+00> : vector<8x64xf32>
    %233 = tpu.matmul %232, %140, %cst_64 {dimension_numbers = #tpu.dot_dimension_numbers<[1], [0], [0], [1], [0, 0, 1, 1], [], []>} : vector<8x32xbf16>, vector<32x64xbf16>, vector<8x64xf32> -> vector<8x64xf32>
    %234 = vector.broadcast %147 : vector<1x64xf32> to vector<8x64xf32>
    %235 = arith.addf %233, %234 : vector<8x64xf32>
    %cst_65 = arith.constant 0.000000e+00 : f32
    %236 = vector.broadcast %cst_65 : f32 to vector<8x64xf32>
    %237 = arith.maximumf %235, %236 : vector<8x64xf32>
    %238 = arith.truncf %237 : vector<8x64xf32> to vector<8x64xbf16>
    %cst_66 = arith.constant dense<0.000000e+00> : vector<8x32xf32>
    %239 = tpu.matmul %238, %142, %cst_66 {dimension_numbers = #tpu.dot_dimension_numbers<[1], [0], [0], [1], [0, 0, 1, 1], [], []>} : vector<8x64xbf16>, vector<64x32xbf16>, vector<8x32xf32> -> vector<8x32xf32>
    %240 = vector.broadcast %148 : vector<1x32xf32> to vector<8x32xf32>
    %241 = arith.addf %239, %240 : vector<8x32xf32>
    %242 = arith.addf %231, %241 : vector<8x32xf32>
    %cst_67 = arith.constant dense<0.000000e+00> : vector<8xf32>
    %243 = vector.multi_reduction <add>, %242, %cst_67 [1] : vector<8x32xf32> to vector<8xf32>
    %244 = vector.shape_cast %243 : vector<8xf32> to vector<8x1xf32>
    %cst_68 = arith.constant 3.200000e+01 : f32
    %245 = vector.broadcast %cst_68 : f32 to vector<8x1xf32>
    %246 = arith.divf %244, %245 : vector<8x1xf32>
    %247 = vector.broadcast %246 : vector<8x1xf32> to vector<8x32xf32>
    %248 = arith.subf %242, %247 : vector<8x32xf32>
    %249 = arith.mulf %248, %248 : vector<8x32xf32>
    %cst_69 = arith.constant dense<0.000000e+00> : vector<8xf32>
    %250 = vector.multi_reduction <add>, %249, %cst_69 [1] : vector<8x32xf32> to vector<8xf32>
    %251 = vector.shape_cast %250 : vector<8xf32> to vector<8x1xf32>
    %cst_70 = arith.constant 3.200000e+01 : f32
    %252 = vector.broadcast %cst_70 : f32 to vector<8x1xf32>
    %253 = arith.divf %251, %252 : vector<8x1xf32>
    %254 = vector.broadcast %246 : vector<8x1xf32> to vector<8x32xf32>
    %255 = arith.subf %242, %254 : vector<8x32xf32>
    %cst_71 = arith.constant 9.99999974E-6 : f32
    %256 = vector.broadcast %cst_71 : f32 to vector<8x1xf32>
    %257 = arith.addf %253, %256 : vector<8x1xf32>
    %258 = math.rsqrt %257 : vector<8x1xf32>
    %259 = vector.broadcast %258 : vector<8x1xf32> to vector<8x32xf32>
    %260 = arith.mulf %255, %259 : vector<8x32xf32>
    %261 = vector.broadcast %151 : vector<1x32xf32> to vector<8x32xf32>
    %262 = arith.mulf %260, %261 : vector<8x32xf32>
    %263 = vector.broadcast %152 : vector<1x32xf32> to vector<8x32xf32>
    %264 = arith.addf %262, %263 : vector<8x32xf32>
    %c0_72 = arith.constant 0 : index
    %c1_73 = arith.constant 1 : index
    %c0_74 = arith.constant 0 : index
    %c0_75 = arith.constant 0 : index
    %265 = vector.load %arg7[%c0_72, %c1_73, %c0_74, %c0_75] : memref<1x2x8x32xf32, #tpu.memory_space<vmem>>, vector<1x1x8x32xf32>
    %266 = vector.shape_cast %265 : vector<1x1x8x32xf32> to vector<8x32xf32>
    %267 = vector.shape_cast %264 : vector<8x32xf32> to vector<1x1x8x32xf32>
    tpu.vector_store %arg7[%c0_72, %c1_73, %c0_74, %c0_75], %267 {strides = array<i32>} : memref<1x2x8x32xf32, #tpu.memory_space<vmem>>, vector<1x1x8x32xf32>,
    return
  }
  func.func @transform_0(%arg0: i32) -> (i32, i32, i32) {
    %c0_i32 = arith.constant 0 : i32
    %c0_i32_0 = arith.constant 0 : i32
    %c0_i32_1 = arith.constant 0 : i32
    return %arg0, %c0_i32, %c0_i32_0 : i32, i32, i32
  }
  func.func @transform_1(%arg0: i32) -> (i32, i32, i32) {
    %c0_i32 = arith.constant 0 : i32
    %c0_i32_0 = arith.constant 0 : i32
    %c0_i32_1 = arith.constant 0 : i32
    %c0_i32_2 = arith.constant 0 : i32
    return %c0_i32, %c0_i32_0, %c0_i32_1 : i32, i32, i32
  }
  func.func @transform_2(%arg0: i32) -> (i32, i32, i32) {
    %c0_i32 = arith.constant 0 : i32
    %c0_i32_0 = arith.constant 0 : i32
    %c0_i32_1 = arith.constant 0 : i32
    %c0_i32_2 = arith.constant 0 : i32
    return %c0_i32, %c0_i32_0, %c0_i32_1 : i32, i32, i32
  }
  func.func @transform_3(%arg0: i32) -> (i32, i32, i32) {
    %c0_i32 = arith.constant 0 : i32
    %c0_i32_0 = arith.constant 0 : i32
    %c0_i32_1 = arith.constant 0 : i32
    %c0_i32_2 = arith.constant 0 : i32
    return %c0_i32, %c0_i32_0, %c0_i32_1 : i32, i32, i32
  }
  func.func @transform_4(%arg0: i32) -> (i32, i32, i32) {
    %c0_i32 = arith.constant 0 : i32
    %c0_i32_0 = arith.constant 0 : i32
    %c0_i32_1 = arith.constant 0 : i32
    %c0_i32_2 = arith.constant 0 : i32
    return %c0_i32, %c0_i32_0, %c0_i32_1 : i32, i32, i32
  }
  func.func @transform_5(%arg0: i32) -> (i32, i32, i32) {
    %c0_i32 = arith.constant 0 : i32
    %c0_i32_0 = arith.constant 0 : i32
    %c0_i32_1 = arith.constant 0 : i32
    %c0_i32_2 = arith.constant 0 : i32
    return %c0_i32, %c0_i32_0, %c0_i32_1 : i32, i32, i32
  }
  func.func @transform_6(%arg0: i32) -> (i32, i32, i32, i32) {
    %c0_i32 = arith.constant 0 : i32
    %c0_i32_0 = arith.constant 0 : i32
    %c0_i32_1 = arith.constant 0 : i32
    %c0_i32_2 = arith.constant 0 : i32
    return %arg0, %c0_i32, %c0_i32_0, %c0_i32_1 : i32, i32, i32, i32
  }
}

</mosaic_0001>

<llo_original>
// kernel: tpu_custom_call.1
$region0: #{tpu_custom_call.1}
  #allocation0 [shape = 'u32[]', space=smem, size = 0x4, offset = 0x4, fixed_abs, tag = 'smem constant byte address 0x4 - core index']
  #allocation1 [shape = 'u32[144,128]{1,0:T(1,128)}', space=vmem, size = 0x12000, scoped, tag = 'internal scratch']
  %s0 = inlined_call_operand.hbm [shape: f32[2,8,32], index: 0, kind: input, shape index: {}]
  %s1 = inlined_call_operand.vmem [shape: bf16[2,32,96], index: 1, kind: input, shape index: {}]
  %s2 = inlined_call_operand.vmem [shape: bf16[2,32,32], index: 2, kind: input, shape index: {}]
  %s3 = inlined_call_operand.vmem [shape: bf16[2,32,64], index: 3, kind: input, shape index: {}]
  %s4 = inlined_call_operand.vmem [shape: bf16[2,64,32], index: 4, kind: input, shape index: {}]
  %s5 = inlined_call_operand.hbm [shape: f32[2,8,128], index: 5, kind: input, shape index: {}]
  %s6 = inlined_call_operand.hbm [shape: f32[2,2,8,32], index: 6, kind: output, shape index: {}]
  %s7 = sld [smem:[#allocation0]]
  $region65: #{tpu_custom_call.1} parent=0
    _
  %s9 = ssub.s32 1, %s7
  %s10 = scalar_select 0, %s9, %s7
  $region1: #{tpu_custom_call.1} parent=0
    #allocation2 [shape = 'u8[8192]{0}', space=vmem, size = 0x2000, scoped, tag = 'input window, operand 0']
    #allocation3 [shape = 's32[2]{0}', space=sflag, size = 0x8, scoped, tag = 'scoped memory for tpu_custom_call.1']
    #allocation4 [shape = 's32[2]{0}', space=sflag, size = 0x8, scoped, tag = 'scoped memory for tpu_custom_call.1']
    #allocation5 [shape = 'u8[8192]{0}', space=vmem, size = 0x2000, scoped, tag = 'input window, operand 5, single buffered']
    #allocation6 [shape = 's32[1]{0}', space=sflag, size = 0x4, scoped, tag = 'scoped memory for tpu_custom_call.1']
    #allocation7 [shape = 'u8[16384]{0}', space=vmem, size = 0x4000, scoped, tag = 'output window, operand 0']
    %11 = vsyncpa [#allocation3], 0
    %s12 = scalar_lea.sflag [#allocation3], 1
    %13 = vsyncpa %s12, 0
    %14 = vsyncpa [#allocation6], 0
    %15 = vsyncpa [#allocation4], 0
    %s16 = scalar_lea.sflag [#allocation4], 1
    %17 = vsyncpa %s16, 0
    loop: start=0, step=1, limit=4
    $region2: #{tpu_custom_call.1} parent=1 // loop_pre_header
      _
    $region3: #{tpu_custom_call.1} parent=1 // loop_header
      %s19 = sphi 0, %s23
      %p20 = scmp.ge.s32.totalorder %s19, 4
      %s29 = sphi 0, %s31
      %s32 = sphi 0, %s29
      %s33 = sphi 0, %s32
      %s49 = sphi 0, %s33
      %s53 = sphi 0, %s53
      %s55 = sphi 0, %s53
      %s56 = sphi 0, %s55
      %s70 = sphi 0, %s56
      %s74 = sphi 0, %s74
      %s76 = sphi 0, %s74
      %s77 = sphi 0, %s76
      %s91 = sphi 0, %s77
      %s95 = sphi 0, %s95
      %s97 = sphi 0, %s95
      %s98 = sphi 0, %s97
      %s112 = sphi 0, %s98
      %s116 = sphi 0, %s116
      %s118 = sphi 0, %s116
      %s119 = sphi 0, %s118
      %s133 = sphi 0, %s119
      %s137 = sphi 0, %s137
      %s139 = sphi 0, %s137
      %s140 = sphi 0, %s139
      %s154 = sphi 0, %s140
      %s160 = sphi 0, %s162
      %s163 = sphi 0, %s160
      %s164 = sphi 0, %s163
      %s180 = sphi 0, %s164
    $region4: #{tpu_custom_call.1} parent=1 // loop_header_branch
      %22 = sbr.rel (%p20) target = $region8
    $region5: #{tpu_custom_call.1} parent=1 // loop_body
      %s24 = ssub.s32 %s19, 1
      %s25 = ssub.s32 %s19, 2
      %s26 = sadd.s32 %s19, 1
      %s27 = ssub.s32 %s19, %s26
      %p28 = scmp.eq.s32.totalorder %s27, 0
      %s30 = sadd.s32 %s29, 1
      %s31 = scalar_select %p28, %s29, %s30
      %p34 = pneg %p28
      %p35 = scmp.eq.s32.totalorder %s19, 1
      %p36 = por %p34, %p35
      %p37 = scmp.ne.s32.totalorder %s29, %s32
      %p38 = scmp.eq.s32.totalorder %s19, 0
      %p39 = por %p37, %p38
      %p40 = scmp.ne.s32.totalorder %s29, %s32
      %p41 = scmp.eq.s32.totalorder %s24, 1
      %p42 = por %p40, %p41
      %p43 = scmp.ne.s32.totalorder %s32, %s33
      %p44 = scmp.eq.s32.totalorder %s24, 0
      %p45 = por %p43, %p44
      %p46 = scmp.ne.s32.totalorder %s32, %s33
      %p47 = scmp.eq.s32.totalorder %s25, 1
      %p48 = por %p46, %p47
      %p50 = scmp.ne.s32.totalorder %s33, %s49
      %p51 = scmp.eq.s32.totalorder %s25, 0
      %p52 = por %p50, %p51
      %s54 = sadd.s32 %s53, 1
      %p57 = scmp.eq.s32.totalorder %s19, 1
      %p58 = scmp.ne.s32.totalorder %s53, %s55
      %p59 = scmp.eq.s32.totalorder %s19, 0
      %p60 = por %p58, %p59
      %p61 = scmp.ne.s32.totalorder %s53, %s55
      %p62 = scmp.eq.s32.totalorder %s24, 1
      %p63 = por %p61, %p62
      %p64 = scmp.ne.s32.totalorder %s55, %s56
      %p65 = scmp.eq.s32.totalorder %s24, 0
      %p66 = por %p64, %p65
      %p67 = scmp.ne.s32.totalorder %s55, %s56
      %p68 = scmp.eq.s32.totalorder %s25, 1
      %p69 = por %p67, %p68
      %p71 = scmp.ne.s32.totalorder %s56, %s70
      %p72 = scmp.eq.s32.totalorder %s25, 0
      %p73 = por %p71, %p72
      %s75 = sadd.s32 %s74, 1
      %p78 = scmp.eq.s32.totalorder %s19, 1
      %p79 = scmp.ne.s32.totalorder %s74, %s76
      %p80 = scmp.eq.s32.totalorder %s19, 0
      %p81 = por %p79, %p80
      %p82 = scmp.ne.s32.totalorder %s74, %s76
      %p83 = scmp.eq.s32.totalorder %s24, 1
      %p84 = por %p82, %p83
      %p85 = scmp.ne.s32.totalorder %s76, %s77
      %p86 = scmp.eq.s32.totalorder %s24, 0
      %p87 = por %p85, %p86
      %p88 = scmp.ne.s32.totalorder %s76, %s77
      %p89 = scmp.eq.s32.totalorder %s25, 1
      %p90 = por %p88, %p89
      %p92 = scmp.ne.s32.totalorder %s77, %s91
      %p93 = scmp.eq.s32.totalorder %s25, 0
      %p94 = por %p92, %p93
      %s96 = sadd.s32 %s95, 1
      %p99 = scmp.eq.s32.totalorder %s19, 1
      %p100 = scmp.ne.s32.totalorder %s95, %s97
      %p101 = scmp.eq.s32.totalorder %s19, 0
      %p102 = por %p100, %p101
      %p103 = scmp.ne.s32.totalorder %s95, %s97
      %p104 = scmp.eq.s32.totalorder %s24, 1
      %p105 = por %p103, %p104
      %p106 = scmp.ne.s32.totalorder %s97, %s98
      %p107 = scmp.eq.s32.totalorder %s24, 0
      %p108 = por %p106, %p107
      %p109 = scmp.ne.s32.totalorder %s97, %s98
      %p110 = scmp.eq.s32.totalorder %s25, 1
      %p111 = por %p109, %p110
      %p113 = scmp.ne.s32.totalorder %s98, %s112
      %p114 = scmp.eq.s32.totalorder %s25, 0
      %p115 = por %p113, %p114
      %s117 = sadd.s32 %s116, 1
      %p120 = scmp.eq.s32.totalorder %s19, 1
      %p121 = scmp.ne.s32.totalorder %s116, %s118
      %p122 = scmp.eq.s32.totalorder %s19, 0
      %p123 = por %p121, %p122
      %p124 = scmp.ne.s32.totalorder %s116, %s118
      %p125 = scmp.eq.s32.totalorder %s24, 1
      %p126 = por %p124, %p125
      %p127 = scmp.ne.s32.totalorder %s118, %s119
      %p128 = scmp.eq.s32.totalorder %s24, 0
      %p129 = por %p127, %p128
      %p130 = scmp.ne.s32.totalorder %s118, %s119
      %p131 = scmp.eq.s32.totalorder %s25, 1
      %p132 = por %p130, %p131
      %p134 = scmp.ne.s32.totalorder %s119, %s133
      %p135 = scmp.eq.s32.totalorder %s25, 0
      %p136 = por %p134, %p135
      %s138 = sadd.s32 %s137, 1
      %p141 = scmp.eq.s32.totalorder %s19, 1
      %p142 = scmp.ne.s32.totalorder %s137, %s139
      %p143 = scmp.eq.s32.totalorder %s19, 0
      %p144 = por %p142, %p143
      %p145 = scmp.ne.s32.totalorder %s137, %s139
      %p146 = scmp.eq.s32.totalorder %s24, 1
      %p147 = por %p145, %p146
      %p148 = scmp.ne.s32.totalorder %s139, %s140
      %p149 = scmp.eq.s32.totalorder %s24, 0
      %p150 = por %p148, %p149
      %p151 = scmp.ne.s32.totalorder %s139, %s140
      %p152 = scmp.eq.s32.totalorder %s25, 1
      %p153 = por %p151, %p152
      %p155 = scmp.ne.s32.totalorder %s140, %s154
      %p156 = scmp.eq.s32.totalorder %s25, 0
      %p157 = por %p155, %p156
      %s158 = ssub.s32 %s19, %s26
      %p159 = scmp.eq.s32.totalorder %s158, 0
      %s161 = sadd.s32 %s160, 1
      %s162 = scalar_select %p159, %s160, %s161
      %p165 = pneg %p159
      %p166 = scmp.eq.s32.totalorder %s19, 1
      %p167 = por %p165, %p166
      %p168 = scmp.ne.s32.totalorder %s160, %s163
      %p169 = scmp.eq.s32.totalorder %s19, 0
      %p170 = por %p168, %p169
      %p171 = scmp.ne.s32.totalorder %s160, %s163
      %p172 = scmp.eq.s32.totalorder %s24, 1
      %p173 = por %p171, %p172
      %p174 = scmp.ne.s32.totalorder %s163, %s164
      %p175 = scmp.eq.s32.totalorder %s24, 0
      %p176 = por %p174, %p175
      %p177 = scmp.ne.s32.totalorder %s163, %s164
      %p178 = scmp.eq.s32.totalorder %s25, 1
      %p179 = por %p177, %p178
      %p181 = scmp.ne.s32.totalorder %s164, %s180
      %p182 = scmp.eq.s32.totalorder %s25, 0
      %p183 = por %p181, %p182
      %p184 = scmp.le.s32.totalorder 1, %s19
      %p185 = scmp.lt.s32.totalorder %s19, 3
      %p186 = pnand %p184, %p185
      %p187 = pneg %p186
      // Predicated region
      $region9: #{tpu_custom_call.1} parent=5 // pred_check
        _
      $region10: #{tpu_custom_call.1} parent=5 // pred_check_branch
        %189 = sbr.rel (%p186) target = $region12
      $region11: #{tpu_custom_call.1} parent=5 // pred_region
        %s190 = ssub.s32 %s19, 1
        // Predicated region
        $region13: #{tpu_custom_call.1} parent=11 // pred_check
          %p191 = pneg %p66
        $region14: #{tpu_custom_call.1} parent=11 // pred_check_branch
          %193 = sbr.rel (%p191) target = $region16
        $region15: #{tpu_custom_call.1} parent=11 // pred_region
          _
        $region16: #{tpu_custom_call.1} parent=11 // pred_fallthru
          _
        // Predicated region
        $region17: #{tpu_custom_call.1} parent=11 // pred_check
          %p194 = pneg %p87
        $region18: #{tpu_custom_call.1} parent=11 // pred_check_branch
          %196 = sbr.rel (%p194) target = $region20
        $region19: #{tpu_custom_call.1} parent=11 // pred_region
          _
        $region20: #{tpu_custom_call.1} parent=11 // pred_fallthru
          _
        // Predicated region
        $region21: #{tpu_custom_call.1} parent=11 // pred_check
          %p197 = pneg %p108
        $region22: #{tpu_custom_call.1} parent=11 // pred_check_branch
          %199 = sbr.rel (%p197) target = $region24
        $region23: #{tpu_custom_call.1} parent=11 // pred_region
          _
        $region24: #{tpu_custom_call.1} parent=11 // pred_fallthru
          _
        // Predicated region
        $region25: #{tpu_custom_call.1} parent=11 // pred_check
          %p200 = pneg %p129
        $region26: #{tpu_custom_call.1} parent=11 // pred_check_branch
          %202 = sbr.rel (%p200) target = $region28
        $region27: #{tpu_custom_call.1} parent=11 // pred_region
          _
        $region28: #{tpu_custom_call.1} parent=11 // pred_fallthru
          _
        // Predicated region
        $region29: #{tpu_custom_call.1} parent=11 // pred_check
          %p203 = pneg %p150
        $region30: #{tpu_custom_call.1} parent=11 // pred_check_branch
          %205 = sbr.rel (%p203) target = $region32
        $region31: #{tpu_custom_call.1} parent=11 // pred_region
          %s207 = ssub.s32 256, 256
          %208 = vsyncadd [#allocation6], %s207
          %s209 = sshll.u32 [#allocation5], 4
          %s210 = int_to_ptr.vmem [resolvable:$true] %s209
          %215 = dma.hbm_to_vmem [thread:$0]  %s5, 256, %s210, [#allocation6], 128, 128, 8
        $region32: #{tpu_custom_call.1} parent=11 // pred_fallthru
          _
      $region12: #{tpu_custom_call.1} parent=5 // pred_fallthru
        _
      %p216 = scmp.lt.s32.totalorder %s19, 2
      // Predicated region
      $region33: #{tpu_custom_call.1} parent=5 // pred_check
        %p217 = pneg %p216
      $region34: #{tpu_custom_call.1} parent=5 // pred_check_branch
        %219 = sbr.rel (%p217) target = $region36
      $region35: #{tpu_custom_call.1} parent=5 // pred_region
        // Predicated region
        $region37: #{tpu_custom_call.1} parent=35 // pred_check
          %p220 = pneg %p39
        $region38: #{tpu_custom_call.1} parent=35 // pred_check_branch
          %222 = sbr.rel (%p220) target = $region40
        $region39: #{tpu_custom_call.1} parent=35 // pred_region
          %s223 = sand.u32 %s29, 1
          %s224 = scalar_lea.sflag [#allocation3], %s223
          %s225 = sand.u32 %s29, 1
          %s226 = smul.addr %s225, 8
          %s227 = scalar_lea.vmem [#allocation2], %s226
          %s229 = ssub.s32 128, 128
          %230 = vsyncadd %s224, %s229
          %s231 = smul.addr %s19, 128
          %s232 = scalar_lea.hbm %s0, %s231
          %s234 = sshll.u32 %s227, 4
          %s235 = int_to_ptr.vmem [resolvable:$true] %s234
          %237 = dma.hbm_to_vmem [thread:$0]  %s232, 128, %s235, %s224
        $region40: #{tpu_custom_call.1} parent=35 // pred_fallthru
          _
      $region36: #{tpu_custom_call.1} parent=5 // pred_fallthru
        _
      %p238 = scmp.le.s32.totalorder 1, %s19
      %p239 = scmp.lt.s32.totalorder %s19, 3
      %p240 = pnand %p238, %p239
      %p241 = pneg %p240
      // Predicated region
      $region41: #{tpu_custom_call.1} parent=5 // pred_check
        _
      $region42: #{tpu_custom_call.1} parent=5 // pred_check_branch
        %243 = sbr.rel (%p240) target = $region44
      $region43: #{tpu_custom_call.1} parent=5 // pred_region
        %s244 = ssub.s32 %s19, 1
        %s245 = sand.u32 %s32, 1
        %s246 = scalar_lea.sflag [#allocation3], %s245
        %s247 = sand.u32 %s32, 1
        %s248 = smul.addr %s247, 8
        %s249 = scalar_lea.vmem [#allocation2], %s248
        // Predicated region
        $region45: #{tpu_custom_call.1} parent=43 // pred_check
          %p250 = pneg %p45
        $region46: #{tpu_custom_call.1} parent=43 // pred_check_branch
          %252 = sbr.rel (%p250) target = $region48
        $region47: #{tpu_custom_call.1} parent=43 // pred_region
          %253 = dma.done %s246, 128
        $region48: #{tpu_custom_call.1} parent=43 // pred_fallthru
          _
        // Predicated region
        $region49: #{tpu_custom_call.1} parent=43 // pred_check
          %p254 = pneg %p150
        $region50: #{tpu_custom_call.1} parent=43 // pred_check_branch
          %256 = sbr.rel (%p254) target = $region52
        $region51: #{tpu_custom_call.1} parent=43 // pred_region
          %257 = dma.done [#allocation6], 256
        $region52: #{tpu_custom_call.1} parent=43 // pred_fallthru
          _
        %s258 = sand.u32 %s32, 1
        %s259 = scalar_lea.sflag [#allocation3], %s258
        %s260 = sand.u32 %s32, 1
        %s261 = smul.addr %s260, 8
        %s262 = scalar_lea.vmem [#allocation2], %s261
        %p263 = pneg %p45
        %p264 = pneg %p42
        %p265 = pneg %p66
        %p266 = pneg %p63
        %p267 = pneg %p87
        %p268 = pneg %p84
        %p269 = pneg %p108
        %p270 = pneg %p105
        %p271 = pneg %p129
        %p272 = pneg %p126
        %p273 = pneg %p150
        %p274 = pneg %p147
        %p275 = pneg %p176
        %p276 = pneg %p173
        %s277 = sand.u32 %s163, 1
        %s278 = scalar_lea.sflag [#allocation4], %s277
        %s279 = sand.u32 %s163, 1
        %s280 = smul.addr %s279, 16
        %s281 = scalar_lea.vmem [#allocation7], %s280
        %v283 = vld [vmem:[%s249] sm:$0xff]
        %v284 = vld [vmem:[%s1] sm:$0xf]
        %v285 = vld [vmem:[%s1 + $0x4] sm:$0xf]
        %v286 = vld [vmem:[%s1 + $0x8] sm:$0xf]
        %v287 = vld [vmem:[%s1 + $0xc] sm:$0xf]
        %v288 = vld [vmem:[%s2] sm:$0xf]
        %v289 = vld [vmem:[%s2 + $0x4] sm:$0xf]
        %v290 = vld [vmem:[%s2 + $0x8] sm:$0xf]
        %v291 = vld [vmem:[%s2 + $0xc] sm:$0xf]
        %v292 = vld [vmem:[%s3] sm:$0xf]
        %v293 = vld [vmem:[%s3 + $0x4] sm:$0xf]
        %v294 = vld [vmem:[%s3 + $0x8] sm:$0xf]
        %v295 = vld [vmem:[%s3 + $0xc] sm:$0xf]
        %v296 = vld [vmem:[%s4] sm:$0xf]
        %v297 = vld [vmem:[%s4 + $0x4] sm:$0xf]
        %v298 = vld [vmem:[%s4 + $0x8] sm:$0xf]
        %v299 = vld [vmem:[%s4 + $0xc] sm:$0xf]
        %v300 = vld [vmem:[%s4 + $0x10] sm:$0xf]
        %v301 = vld [vmem:[%s4 + $0x14] sm:$0xf]
        %v302 = vld [vmem:[%s4 + $0x18] sm:$0xf]
        %v303 = vld [vmem:[%s4 + $0x1c] sm:$0xf]
        %v304 = vld [vmem:[#allocation5] sm:$0xff]
        %v305 = vpack.c.bf16 %v283, %v283
        %v306 = vlaneseq
        %v307 = vshrl.u32 %v306, 7
        %v308 = vsub.s32 0, %v307
        %v309 = vrot.slane %v304, %v308
        %v314 = vunpack.c.l.b16 %v284
        %v315 = vunpack.c.l.b16 %v285
        %v316 = vunpack.c.l.b16 %v286
        %v317 = vunpack.c.l.b16 %v287
        %v318 = vpack.c.b16 %v315, %v314
        %v319 = vpack.c.b16 %v317, %v316
        %vm322 = vcmask 261120
        %v324 = vsel %vm322, %v305, 0
        %326 = vmatprep.subr.bf16.mxu0 0
        %327 = vmatpush1.bf16.msra.mxu0 0
        %328 = vmatprep.subr.bf16.mxu0 0
        %329 = vmatpush1.bf16.msra.mxu0 0
        %330 = vmatprep.subr.bf16.mxu0 0
        %331 = vmatpush1.bf16.msra.mxu0 0
        %332 = vmatprep.subr.bf16.mxu0 0
        %333 = vmatpush1.bf16.msra.mxu0 0
        %334 = vmatprep.subr.bf16.mxu0 0
        %335 = vmatpush1.bf16.msra.mxu0 0
        %336 = vmatprep.subr.bf16.mxu0 0
        %337 = vmatpush1.bf16.msra.mxu0 0
        %338 = vmatprep.subr.bf16.mxu0 0
        %339 = vmatpush1.bf16.msra.mxu0 %v319
        %340 = vmatprep.subr.bf16.mxu0 0
        %341 = vmatpush1.bf16.msra.mxu0 %v318
        %342 = vmatprep.subr.bf16.mxu0 0
        %343 = vmatpush2.bf16.msra.mxu0 0
        %344 = vmatprep.subr.bf16.mxu0 0
        %345 = vmatpush2.bf16.msra.mxu0 0
        %346 = vmatprep.subr.bf16.mxu0 0
        %347 = vmatpush2.bf16.msra.mxu0 0
        %348 = vmatprep.subr.bf16.mxu0 0
        %349 = vmatpush2.bf16.msra.mxu0 0
        %350 = vmatprep.subr.bf16.mxu0 0
        %351 = vmatpush2.bf16.msra.mxu0 0
        %352 = vmatprep.subr.bf16.mxu0 0
        %353 = vmatpush2.bf16.msra.mxu0 0
        %354 = vmatprep.subr.bf16.mxu0 0
        %355 = vmatpush2.bf16.msra.mxu0 0
        %356 = vmatprep.subr.bf16.mxu0 0
        %357 = vmatpush2.bf16.msra.mxu0 0
        %358 = vmatprep.mubr.bf16.mxu0 0
        %359 = vmatmul.mubr.bf16.gmra.mxu0 %v324
        %v360 = vpop.f32.mrf.mxu0
        %v361 = vadd.f32 %v309, %v360
        %v362 = vpop.f32.mrf.mxu0
        %v363 = vpop.f32.mrf.mxu0
        %v364 = vpop.f32.mrf.mxu0
        %365 = vdwg.mxu0
        %367 = vrot.lane.b32.xlu0 %v361, 120
        %v368 = vpop.permute.xlu0 %367
        %369 = vrot.lane.b32.xlu0 %v361, 112
        %v370 = vpop.permute.xlu0 %369
        %371 = vrot.lane.b32.xlu0 %v361, 104
        %v372 = vpop.permute.xlu0 %371
        %373 = vrot.lane.b32.xlu0 %v361, 96
        %v374 = vpop.permute.xlu0 %373
        %vm375 = vcmask 64512
        %v376 = vsel %vm375, %v361, 0
        %v378 = vsel %vm375, %v374, 0
        %380 = vmatprep.subr.mxu0 0.0
        %381 = vmatpush1.xpose.msra.mxu0 0.0
        %382 = vmatprep.subr.mxu0 0.0
        %383 = vmatpush1.xpose.msra.mxu0 0.0
        %384 = vmatprep.subr.mxu0 0.0
        %385 = vmatpush1.xpose.msra.mxu0 0.0
        %386 = vmatprep.subr.mxu0 0.0
        %387 = vmatpush1.xpose.msra.mxu0 0.0
        %388 = vmatprep.subr.mxu0 0.0
        %389 = vmatpush1.xpose.msra.mxu0 0.0
        %390 = vmatprep.subr.mxu0 0.0
        %391 = vmatpush1.xpose.msra.mxu0 0.0
        %392 = vmatprep.subr.mxu0 0.0
        %393 = vmatpush1.xpose.msra.mxu0 0.0
        %394 = vmatprep.subr.mxu0 0.0
        %395 = vmatpush1.xpose.msra.mxu0 0.0
        %396 = vmatprep.subr.mxu0 0.0
        %397 = vmatpush1.xpose.msra.mxu0 0.0
        %398 = vmatprep.subr.mxu0 0.0
        %399 = vmatpush1.xpose.msra.mxu0 0.0
        %400 = vmatprep.subr.mxu0 0.0
        %401 = vmatpush1.xpose.msra.mxu0 0.0
        %402 = vmatprep.subr.mxu0 0.0
        %403 = vmatpush1.xpose.msra.mxu0 0.0
        %404 = vmatprep.subr.mxu0 0.0
        %405 = vmatpush1.xpose.msra.mxu0 0.0
        %406 = vmatprep.subr.mxu0 0.0
        %407 = vmatpush1.xpose.msra.mxu0 0.0
        %408 = vmatprep.subr.mxu0 0.0
        %409 = vmatpush1.xpose.msra.mxu0 0.0
        %410 = vmatprep.subr.mxu0 0.0
        %411 = vmatpush1.xpose.msra.mxu0 %v378
        %412 = vmatprep.subr.mxu0 0.0
        %413 = vmatpush2.xpose.msra.mxu0 0.0
        %414 = vmatprep.subr.mxu0 0.0
        %415 = vmatpush2.xpose.msra.mxu0 0.0
        %416 = vmatprep.subr.mxu0 0.0
        %417 = vmatpush2.xpose.msra.mxu0 0.0
        %418 = vmatprep.subr.mxu0 0.0
        %419 = vmatpush2.xpose.msra.mxu0 0.0
        %420 = vmatprep.subr.mxu0 0.0
        %421 = vmatpush2.xpose.msra.mxu0 0.0
        %422 = vmatprep.subr.mxu0 0.0
        %423 = vmatpush2.xpose.msra.mxu0 0.0
        %424 = vmatprep.subr.mxu0 0.0
        %425 = vmatpush2.xpose.msra.mxu0 0.0
        %426 = vmatprep.subr.mxu0 0.0
        %427 = vmatpush2.xpose.msra.mxu0 0.0
        %428 = vmatprep.subr.mxu0 0.0
        %429 = vmatpush2.xpose.msra.mxu0 0.0
        %430 = vmatprep.subr.mxu0 0.0
        %431 = vmatpush2.xpose.msra.mxu0 0.0
        %432 = vmatprep.subr.mxu0 0.0
        %433 = vmatpush2.xpose.msra.mxu0 0.0
        %434 = vmatprep.subr.mxu0 0.0
        %435 = vmatpush2.xpose.msra.mxu0 0.0
        %436 = vmatprep.subr.mxu0 0.0
        %437 = vmatpush2.xpose.msra.mxu0 0.0
        %438 = vmatprep.subr.mxu0 0.0
        %439 = vmatpush2.xpose.msra.mxu0 0.0
        %440 = vmatprep.subr.mxu0 0.0
        %441 = vmatpush2.xpose.msra.mxu0 0.0
        %442 = vmatprep.subr.mxu0 0.0
        %443 = vmatpush2.xpose.msra.mxu0 0.0
        %444 = vmatprep.mubr.f32.mxu0 0.0
        %445 = vmatmul.mubr.f32.gmra.mxu0 %v376
        %v446 = vpop.f32.mrf.mxu0
        %v447 = vadd.f32 0.0, %v446
        %v448 = vpop.f32.mrf.mxu0
        %449 = vdwg.mxu0
        %450 = vrot.lane.b32.xlu0 %v368, 96
        %v451 = vpop.permute.xlu0 %450
        %v452 = vsel %vm375, %v368, 0
        %v454 = vsel %vm375, %v451, 0
        %456 = vmatprep.subr.mxu0 0.0
        %457 = vmatpush1.xpose.msra.mxu0 0.0
        %458 = vmatprep.subr.mxu0 0.0
        %459 = vmatpush1.xpose.msra.mxu0 0.0
        %460 = vmatprep.subr.mxu0 0.0
        %461 = vmatpush1.xpose.msra.mxu0 0.0
        %462 = vmatprep.subr.mxu0 0.0
        %463 = vmatpush1.xpose.msra.mxu0 0.0
        %464 = vmatprep.subr.mxu0 0.0
        %465 = vmatpush1.xpose.msra.mxu0 0.0
        %466 = vmatprep.subr.mxu0 0.0
        %467 = vmatpush1.xpose.msra.mxu0 0.0
        %468 = vmatprep.subr.mxu0 0.0
        %469 = vmatpush1.xpose.msra.mxu0 0.0
        %470 = vmatprep.subr.mxu0 0.0
        %471 = vmatpush1.xpose.msra.mxu0 0.0
        %472 = vmatprep.subr.mxu0 0.0
        %473 = vmatpush1.xpose.msra.mxu0 0.0
        %474 = vmatprep.subr.mxu0 0.0
        %475 = vmatpush1.xpose.msra.mxu0 0.0
        %476 = vmatprep.subr.mxu0 0.0
        %477 = vmatpush1.xpose.msra.mxu0 0.0
        %478 = vmatprep.subr.mxu0 0.0
        %479 = vmatpush1.xpose.msra.mxu0 0.0
        %480 = vmatprep.subr.mxu0 0.0
        %481 = vmatpush1.xpose.msra.mxu0 0.0
        %482 = vmatprep.subr.mxu0 0.0
        %483 = vmatpush1.xpose.msra.mxu0 0.0
        %484 = vmatprep.subr.mxu0 0.0
        %485 = vmatpush1.xpose.msra.mxu0 0.0
        %486 = vmatprep.subr.mxu0 0.0
        %487 = vmatpush1.xpose.msra.mxu0 %v454
        %488 = vmatprep.subr.mxu0 0.0
        %489 = vmatpush2.xpose.msra.mxu0 0.0
        %490 = vmatprep.subr.mxu0 0.0
        %491 = vmatpush2.xpose.msra.mxu0 0.0
        %492 = vmatprep.subr.mxu0 0.0
        %493 = vmatpush2.xpose.msra.mxu0 0.0
        %494 = vmatprep.subr.mxu0 0.0
        %495 = vmatpush2.xpose.msra.mxu0 0.0
        %496 = vmatprep.subr.mxu0 0.0
        %497 = vmatpush2.xpose.msra.mxu0 0.0
        %498 = vmatprep.subr.mxu0 0.0
        %499 = vmatpush2.xpose.msra.mxu0 0.0
        %500 = vmatprep.subr.mxu0 0.0
        %501 = vmatpush2.xpose.msra.mxu0 0.0
        %502 = vmatprep.subr.mxu0 0.0
        %503 = vmatpush2.xpose.msra.mxu0 0.0
        %504 = vmatprep.subr.mxu0 0.0
        %505 = vmatpush2.xpose.msra.mxu0 0.0
        %506 = vmatprep.subr.mxu0 0.0
        %507 = vmatpush2.xpose.msra.mxu0 0.0
        %508 = vmatprep.subr.mxu0 0.0
        %509 = vmatpush2.xpose.msra.mxu0 0.0
        %510 = vmatprep.subr.mxu0 0.0
        %511 = vmatpush2.xpose.msra.mxu0 0.0
        %512 = vmatprep.subr.mxu0 0.0
        %513 = vmatpush2.xpose.msra.mxu0 0.0
        %514 = vmatprep.subr.mxu0 0.0
        %515 = vmatpush2.xpose.msra.mxu0 0.0
        %516 = vmatprep.subr.mxu0 0.0
        %517 = vmatpush2.xpose.msra.mxu0 0.0
        %518 = vmatprep.subr.mxu0 0.0
        %519 = vmatpush2.xpose.msra.mxu0 0.0
        %520 = vmatprep.mubr.f32.mxu0 0.0
        %521 = vmatmul.mubr.f32.gmra.mxu0 %v452
        %v522 = vpop.f32.mrf.mxu0
        %v523 = vadd.f32 0.0, %v522
        %v524 = vpop.f32.mrf.mxu0
        %525 = vdwg.mxu0
        %526 = vrot.lane.b32.xlu0 %v370, 96
        %v527 = vpop.permute.xlu0 %526
        %v528 = vsel %vm375, %v370, 0
        %v530 = vsel %vm375, %v527, 0
        %532 = vmatprep.subr.mxu0 0.0
        %533 = vmatpush1.xpose.msra.mxu0 0.0
        %534 = vmatprep.subr.mxu0 0.0
        %535 = vmatpush1.xpose.msra.mxu0 0.0
        %536 = vmatprep.subr.mxu0 0.0
        %537 = vmatpush1.xpose.msra.mxu0 0.0
        %538 = vmatprep.subr.mxu0 0.0
        %539 = vmatpush1.xpose.msra.mxu0 0.0
        %540 = vmatprep.subr.mxu0 0.0
        %541 = vmatpush1.xpose.msra.mxu0 0.0
        %542 = vmatprep.subr.mxu0 0.0
        %543 = vmatpush1.xpose.msra.mxu0 0.0
        %544 = vmatprep.subr.mxu0 0.0
        %545 = vmatpush1.xpose.msra.mxu0 0.0
        %546 = vmatprep.subr.mxu0 0.0
        %547 = vmatpush1.xpose.msra.mxu0 0.0
        %548 = vmatprep.subr.mxu0 0.0
        %549 = vmatpush1.xpose.msra.mxu0 0.0
        %550 = vmatprep.subr.mxu0 0.0
        %551 = vmatpush1.xpose.msra.mxu0 0.0
        %552 = vmatprep.subr.mxu0 0.0
        %553 = vmatpush1.xpose.msra.mxu0 0.0
        %554 = vmatprep.subr.mxu0 0.0
        %555 = vmatpush1.xpose.msra.mxu0 0.0
        %556 = vmatprep.subr.mxu0 0.0
        %557 = vmatpush1.xpose.msra.mxu0 0.0
        %558 = vmatprep.subr.mxu0 0.0
        %559 = vmatpush1.xpose.msra.mxu0 0.0
        %560 = vmatprep.subr.mxu0 0.0
        %561 = vmatpush1.xpose.msra.mxu0 0.0
        %562 = vmatprep.subr.mxu0 0.0
        %563 = vmatpush1.xpose.msra.mxu0 %v530
        %564 = vmatprep.subr.mxu0 0.0
        %565 = vmatpush2.xpose.msra.mxu0 0.0
        %566 = vmatprep.subr.mxu0 0.0
        %567 = vmatpush2.xpose.msra.mxu0 0.0
        %568 = vmatprep.subr.mxu0 0.0
        %569 = vmatpush2.xpose.msra.mxu0 0.0
        %570 = vmatprep.subr.mxu0 0.0
        %571 = vmatpush2.xpose.msra.mxu0 0.0
        %572 = vmatprep.subr.mxu0 0.0
        %573 = vmatpush2.xpose.msra.mxu0 0.0
        %574 = vmatprep.subr.mxu0 0.0
        %575 = vmatpush2.xpose.msra.mxu0 0.0
        %576 = vmatprep.subr.mxu0 0.0
        %577 = vmatpush2.xpose.msra.mxu0 0.0
        %578 = vmatprep.subr.mxu0 0.0
        %579 = vmatpush2.xpose.msra.mxu0 0.0
        %580 = vmatprep.subr.mxu0 0.0
        %581 = vmatpush2.xpose.msra.mxu0 0.0
        %582 = vmatprep.subr.mxu0 0.0
        %583 = vmatpush2.xpose.msra.mxu0 0.0
        %584 = vmatprep.subr.mxu0 0.0
        %585 = vmatpush2.xpose.msra.mxu0 0.0
        %586 = vmatprep.subr.mxu0 0.0
        %587 = vmatpush2.xpose.msra.mxu0 0.0
        %588 = vmatprep.subr.mxu0 0.0
        %589 = vmatpush2.xpose.msra.mxu0 0.0
        %590 = vmatprep.subr.mxu0 0.0
        %591 = vmatpush2.xpose.msra.mxu0 0.0
        %592 = vmatprep.subr.mxu0 0.0
        %593 = vmatpush2.xpose.msra.mxu0 0.0
        %594 = vmatprep.subr.mxu0 0.0
        %595 = vmatpush2.xpose.msra.mxu0 0.0
        %596 = vmatprep.mubr.f32.mxu0 0.0
        %597 = vmatmul.mubr.f32.gmra.mxu0 %v528
        %v598 = vpop.f32.mrf.mxu0
        %v599 = vadd.f32 0.0, %v598
        %v600 = vpop.f32.mrf.mxu0
        %601 = vdwg.mxu0
        %602 = vrot.lane.b32.xlu0 %v372, 96
        %v603 = vpop.permute.xlu0 %602
        %v604 = vsel %vm375, %v372, 0
        %v606 = vsel %vm375, %v603, 0
        %608 = vmatprep.subr.mxu0 0.0
        %609 = vmatpush1.xpose.msra.mxu0 0.0
        %610 = vmatprep.subr.mxu0 0.0
        %611 = vmatpush1.xpose.msra.mxu0 0.0
        %612 = vmatprep.subr.mxu0 0.0
        %613 = vmatpush1.xpose.msra.mxu0 0.0
        %614 = vmatprep.subr.mxu0 0.0
        %615 = vmatpush1.xpose.msra.mxu0 0.0
        %616 = vmatprep.subr.mxu0 0.0
        %617 = vmatpush1.xpose.msra.mxu0 0.0
        %618 = vmatprep.subr.mxu0 0.0
        %619 = vmatpush1.xpose.msra.mxu0 0.0
        %620 = vmatprep.subr.mxu0 0.0
        %621 = vmatpush1.xpose.msra.mxu0 0.0
        %622 = vmatprep.subr.mxu0 0.0
        %623 = vmatpush1.xpose.msra.mxu0 0.0
        %624 = vmatprep.subr.mxu0 0.0
        %625 = vmatpush1.xpose.msra.mxu0 0.0
        %626 = vmatprep.subr.mxu0 0.0
        %627 = vmatpush1.xpose.msra.mxu0 0.0
        %628 = vmatprep.subr.mxu0 0.0
        %629 = vmatpush1.xpose.msra.mxu0 0.0
        %630 = vmatprep.subr.mxu0 0.0
        %631 = vmatpush1.xpose.msra.mxu0 0.0
        %632 = vmatprep.subr.mxu0 0.0
        %633 = vmatpush1.xpose.msra.mxu0 0.0
        %634 = vmatprep.subr.mxu0 0.0
        %635 = vmatpush1.xpose.msra.mxu0 0.0
        %636 = vmatprep.subr.mxu0 0.0
        %637 = vmatpush1.xpose.msra.mxu0 0.0
        %638 = vmatprep.subr.mxu0 0.0
        %639 = vmatpush1.xpose.msra.mxu0 %v606
        %640 = vmatprep.subr.mxu0 0.0
        %641 = vmatpush2.xpose.msra.mxu0 0.0
        %642 = vmatprep.subr.mxu0 0.0
        %643 = vmatpush2.xpose.msra.mxu0 0.0
        %644 = vmatprep.subr.mxu0 0.0
        %645 = vmatpush2.xpose.msra.mxu0 0.0
        %646 = vmatprep.subr.mxu0 0.0
        %647 = vmatpush2.xpose.msra.mxu0 0.0
        %648 = vmatprep.subr.mxu0 0.0
        %649 = vmatpush2.xpose.msra.mxu0 0.0
        %650 = vmatprep.subr.mxu0 0.0
        %651 = vmatpush2.xpose.msra.mxu0 0.0
        %652 = vmatprep.subr.mxu0 0.0
        %653 = vmatpush2.xpose.msra.mxu0 0.0
        %654 = vmatprep.subr.mxu0 0.0
        %655 = vmatpush2.xpose.msra.mxu0 0.0
        %656 = vmatprep.subr.mxu0 0.0
        %657 = vmatpush2.xpose.msra.mxu0 0.0
        %658 = vmatprep.subr.mxu0 0.0
        %659 = vmatpush2.xpose.msra.mxu0 0.0
        %660 = vmatprep.subr.mxu0 0.0
        %661 = vmatpush2.xpose.msra.mxu0 0.0
        %662 = vmatprep.subr.mxu0 0.0
        %663 = vmatpush2.xpose.msra.mxu0 0.0
        %664 = vmatprep.subr.mxu0 0.0
        %665 = vmatpush2.xpose.msra.mxu0 0.0
        %666 = vmatprep.subr.mxu0 0.0
        %667 = vmatpush2.xpose.msra.mxu0 0.0
        %668 = vmatprep.subr.mxu0 0.0
        %669 = vmatpush2.xpose.msra.mxu0 0.0
        %670 = vmatprep.subr.mxu0 0.0
        %671 = vmatpush2.xpose.msra.mxu0 0.0
        %672 = vmatprep.mubr.f32.mxu0 0.0
        %673 = vmatmul.mubr.f32.gmra.mxu0 %v604
        %v674 = vpop.f32.mrf.mxu0
        %v675 = vadd.f32 0.0, %v674
        %v676 = vpop.f32.mrf.mxu0
        %677 = vdwg.mxu0
        %v678 = vsel %vm375, %v447, -inf
        %679 = vmax.xlane.f32.xlu0 %v678
        %v680 = vpop.xlane.xlu0 %679
        %v681 = vsel %vm375, %v523, -inf
        %682 = vmax.xlane.f32.xlu0 %v681
        %v683 = vpop.xlane.xlu0 %682
        %v684 = vsel %vm375, %v599, -inf
        %685 = vmax.xlane.f32.xlu0 %v684
        %v686 = vpop.xlane.xlu0 %685
        %v687 = vsel %vm375, %v675, -inf
        %688 = vmax.xlane.f32.xlu0 %v687
        %v689 = vpop.xlane.xlu0 %688
        %v690 = vsub.f32 %v447, %v680
        %v691 = vsub.f32 %v523, %v683
        %v692 = vsub.f32 %v599, %v686
        %v693 = vsub.f32 %v675, %v689
        %v694 = vmul.f32 %v690, 1.442695
        %v695 = vpow.pop %v694
        %v696 = vmul.f32 %v691, 1.442695
        %v697 = vpow.pop %v696
        %v698 = vmul.f32 %v692, 1.442695
        %v699 = vpow.pop %v698
        %v700 = vmul.f32 %v693, 1.442695
        %v701 = vpow.pop %v700
        %v702 = vsel %vm375, %v695, 0.0
        %703 = vadd.xlane.f32.xlu0 %v702
        %v704 = vpop.xlane.xlu0 %703
        %v705 = vsel %vm375, %v697, 0.0
        %706 = vadd.xlane.f32.xlu0 %v705
        %v707 = vpop.xlane.xlu0 %706
        %v708 = vsel %vm375, %v699, 0.0
        %709 = vadd.xlane.f32.xlu0 %v708
        %v710 = vpop.xlane.xlu0 %709
        %v711 = vsel %vm375, %v701, 0.0
        %712 = vadd.xlane.f32.xlu0 %v711
        %v713 = vpop.xlane.xlu0 %712
        %v714 = vrcp.pop %v704
        %v715 = vrcp.pop %v707
        %v716 = vrcp.pop %v710
        %v717 = vrcp.pop %v713
        %v718 = vmul.f32 %v695, %v714
        %v719 = vmul.f32 %v697, %v715
        %v720 = vmul.f32 %v699, %v716
        %v721 = vmul.f32 %v701, %v717
        %722 = vrot.lane.b32.xlu0 %v361, 64
        %v723 = vpop.permute.xlu0 %722
        %v726 = vsel %vm375, %v718, 0
        %728 = vmatprep.subr.mxu0 0.0
        %729 = vmatpush1.msra.mxu0 0.0
        %730 = vmatprep.subr.mxu0 0.0
        %731 = vmatpush1.msra.mxu0 0.0
        %732 = vmatprep.subr.mxu0 0.0
        %733 = vmatpush1.msra.mxu0 0.0
        %734 = vmatprep.subr.mxu0 0.0
        %735 = vmatpush1.msra.mxu0 0.0
        %736 = vmatprep.subr.mxu0 0.0
        %737 = vmatpush1.msra.mxu0 0.0
        %738 = vmatprep.subr.mxu0 0.0
        %739 = vmatpush1.msra.mxu0 0.0
        %740 = vmatprep.subr.mxu0 0.0
        %741 = vmatpush1.msra.mxu0 0.0
        %742 = vmatprep.subr.mxu0 0.0
        %743 = vmatpush1.msra.mxu0 0.0
        %744 = vmatprep.subr.mxu0 0.0
        %745 = vmatpush1.msra.mxu0 0.0
        %746 = vmatprep.subr.mxu0 0.0
        %747 = vmatpush1.msra.mxu0 0.0
        %748 = vmatprep.subr.mxu0 0.0
        %749 = vmatpush1.msra.mxu0 0.0
        %750 = vmatprep.subr.mxu0 0.0
        %751 = vmatpush1.msra.mxu0 0.0
        %752 = vmatprep.subr.mxu0 0.0
        %753 = vmatpush1.msra.mxu0 0.0
        %754 = vmatprep.subr.mxu0 0.0
        %755 = vmatpush1.msra.mxu0 0.0
        %756 = vmatprep.subr.mxu0 0.0
        %757 = vmatpush1.msra.mxu0 0.0
        %758 = vmatprep.subr.mxu0 0.0
        %759 = vmatpush1.msra.mxu0 %v723
        %760 = vmatprep.subr.mxu0 0.0
        %761 = vmatpush2.msra.mxu0 0.0
        %762 = vmatprep.subr.mxu0 0.0
        %763 = vmatpush2.msra.mxu0 0.0
        %764 = vmatprep.subr.mxu0 0.0
        %765 = vmatpush2.msra.mxu0 0.0
        %766 = vmatprep.subr.mxu0 0.0
        %767 = vmatpush2.msra.mxu0 0.0
        %768 = vmatprep.subr.mxu0 0.0
        %769 = vmatpush2.msra.mxu0 0.0
        %770 = vmatprep.subr.mxu0 0.0
        %771 = vmatpush2.msra.mxu0 0.0
        %772 = vmatprep.subr.mxu0 0.0
        %773 = vmatpush2.msra.mxu0 0.0
        %774 = vmatprep.subr.mxu0 0.0
        %775 = vmatpush2.msra.mxu0 0.0
        %776 = vmatprep.subr.mxu0 0.0
        %777 = vmatpush2.msra.mxu0 0.0
        %778 = vmatprep.subr.mxu0 0.0
        %779 = vmatpush2.msra.mxu0 0.0
        %780 = vmatprep.subr.mxu0 0.0
        %781 = vmatpush2.msra.mxu0 0.0
        %782 = vmatprep.subr.mxu0 0.0
        %783 = vmatpush2.msra.mxu0 0.0
        %784 = vmatprep.subr.mxu0 0.0
        %785 = vmatpush2.msra.mxu0 0.0
        %786 = vmatprep.subr.mxu0 0.0
        %787 = vmatpush2.msra.mxu0 0.0
        %788 = vmatprep.subr.mxu0 0.0
        %789 = vmatpush2.msra.mxu0 0.0
        %790 = vmatprep.subr.mxu0 0.0
        %791 = vmatpush2.msra.mxu0 0.0
        %792 = vmatprep.mubr.f32.mxu0 0.0
        %793 = vmatmul.mubr.f32.gmra.mxu0 %v726
        %v794 = vpop.f32.mrf.mxu0
        %v795 = vadd.f32 0.0, %v794
        %v796 = vpop.f32.mrf.mxu0
        %797 = vdwg.mxu0
        %798 = vrot.lane.b32.xlu0 %v368, 64
        %v799 = vpop.permute.xlu0 %798
        %v802 = vsel %vm375, %v719, 0
        %804 = vmatprep.subr.mxu0 0.0
        %805 = vmatpush1.msra.mxu0 0.0
        %806 = vmatprep.subr.mxu0 0.0
        %807 = vmatpush1.msra.mxu0 0.0
        %808 = vmatprep.subr.mxu0 0.0
        %809 = vmatpush1.msra.mxu0 0.0
        %810 = vmatprep.subr.mxu0 0.0
        %811 = vmatpush1.msra.mxu0 0.0
        %812 = vmatprep.subr.mxu0 0.0
        %813 = vmatpush1.msra.mxu0 0.0
        %814 = vmatprep.subr.mxu0 0.0
        %815 = vmatpush1.msra.mxu0 0.0
        %816 = vmatprep.subr.mxu0 0.0
        %817 = vmatpush1.msra.mxu0 0.0
        %818 = vmatprep.subr.mxu0 0.0
        %819 = vmatpush1.msra.mxu0 0.0
        %820 = vmatprep.subr.mxu0 0.0
        %821 = vmatpush1.msra.mxu0 0.0
        %822 = vmatprep.subr.mxu0 0.0
        %823 = vmatpush1.msra.mxu0 0.0
        %824 = vmatprep.subr.mxu0 0.0
        %825 = vmatpush1.msra.mxu0 0.0
        %826 = vmatprep.subr.mxu0 0.0
        %827 = vmatpush1.msra.mxu0 0.0
        %828 = vmatprep.subr.mxu0 0.0
        %829 = vmatpush1.msra.mxu0 0.0
        %830 = vmatprep.subr.mxu0 0.0
        %831 = vmatpush1.msra.mxu0 0.0
        %832 = vmatprep.subr.mxu0 0.0
        %833 = vmatpush1.msra.mxu0 0.0
        %834 = vmatprep.subr.mxu0 0.0
        %835 = vmatpush1.msra.mxu0 %v799
        %836 = vmatprep.subr.mxu0 0.0
        %837 = vmatpush2.msra.mxu0 0.0
        %838 = vmatprep.subr.mxu0 0.0
        %839 = vmatpush2.msra.mxu0 0.0
        %840 = vmatprep.subr.mxu0 0.0
        %841 = vmatpush2.msra.mxu0 0.0
        %842 = vmatprep.subr.mxu0 0.0
        %843 = vmatpush2.msra.mxu0 0.0
        %844 = vmatprep.subr.mxu0 0.0
        %845 = vmatpush2.msra.mxu0 0.0
        %846 = vmatprep.subr.mxu0 0.0
        %847 = vmatpush2.msra.mxu0 0.0
        %848 = vmatprep.subr.mxu0 0.0
        %849 = vmatpush2.msra.mxu0 0.0
        %850 = vmatprep.subr.mxu0 0.0
        %851 = vmatpush2.msra.mxu0 0.0
        %852 = vmatprep.subr.mxu0 0.0
        %853 = vmatpush2.msra.mxu0 0.0
        %854 = vmatprep.subr.mxu0 0.0
        %855 = vmatpush2.msra.mxu0 0.0
        %856 = vmatprep.subr.mxu0 0.0
        %857 = vmatpush2.msra.mxu0 0.0
        %858 = vmatprep.subr.mxu0 0.0
        %859 = vmatpush2.msra.mxu0 0.0
        %860 = vmatprep.subr.mxu0 0.0
        %861 = vmatpush2.msra.mxu0 0.0
        %862 = vmatprep.subr.mxu0 0.0
        %863 = vmatpush2.msra.mxu0 0.0
        %864 = vmatprep.subr.mxu0 0.0
        %865 = vmatpush2.msra.mxu0 0.0
        %866 = vmatprep.subr.mxu0 0.0
        %867 = vmatpush2.msra.mxu0 0.0
        %868 = vmatprep.mubr.f32.mxu0 0.0
        %869 = vmatmul.mubr.f32.gmra.mxu0 %v802
        %v870 = vpop.f32.mrf.mxu0
        %v871 = vadd.f32 0.0, %v870
        %v872 = vpop.f32.mrf.mxu0
        %873 = vdwg.mxu0
        %874 = vrot.lane.b32.xlu0 %v370, 64
        %v875 = vpop.permute.xlu0 %874
        %v878 = vsel %vm375, %v720, 0
        %880 = vmatprep.subr.mxu0 0.0
        %881 = vmatpush1.msra.mxu0 0.0
        %882 = vmatprep.subr.mxu0 0.0
        %883 = vmatpush1.msra.mxu0 0.0
        %884 = vmatprep.subr.mxu0 0.0
        %885 = vmatpush1.msra.mxu0 0.0
        %886 = vmatprep.subr.mxu0 0.0
        %887 = vmatpush1.msra.mxu0 0.0
        %888 = vmatprep.subr.mxu0 0.0
        %889 = vmatpush1.msra.mxu0 0.0
        %890 = vmatprep.subr.mxu0 0.0
        %891 = vmatpush1.msra.mxu0 0.0
        %892 = vmatprep.subr.mxu0 0.0
        %893 = vmatpush1.msra.mxu0 0.0
        %894 = vmatprep.subr.mxu0 0.0
        %895 = vmatpush1.msra.mxu0 0.0
        %896 = vmatprep.subr.mxu0 0.0
        %897 = vmatpush1.msra.mxu0 0.0
        %898 = vmatprep.subr.mxu0 0.0
        %899 = vmatpush1.msra.mxu0 0.0
        %900 = vmatprep.subr.mxu0 0.0
        %901 = vmatpush1.msra.mxu0 0.0
        %902 = vmatprep.subr.mxu0 0.0
        %903 = vmatpush1.msra.mxu0 0.0
        %904 = vmatprep.subr.mxu0 0.0
        %905 = vmatpush1.msra.mxu0 0.0
        %906 = vmatprep.subr.mxu0 0.0
        %907 = vmatpush1.msra.mxu0 0.0
        %908 = vmatprep.subr.mxu0 0.0
        %909 = vmatpush1.msra.mxu0 0.0
        %910 = vmatprep.subr.mxu0 0.0
        %911 = vmatpush1.msra.mxu0 %v875
        %912 = vmatprep.subr.mxu0 0.0
        %913 = vmatpush2.msra.mxu0 0.0
        %914 = vmatprep.subr.mxu0 0.0
        %915 = vmatpush2.msra.mxu0 0.0
        %916 = vmatprep.subr.mxu0 0.0
        %917 = vmatpush2.msra.mxu0 0.0
        %918 = vmatprep.subr.mxu0 0.0
        %919 = vmatpush2.msra.mxu0 0.0
        %920 = vmatprep.subr.mxu0 0.0
        %921 = vmatpush2.msra.mxu0 0.0
        %922 = vmatprep.subr.mxu0 0.0
        %923 = vmatpush2.msra.mxu0 0.0
        %924 = vmatprep.subr.mxu0 0.0
        %925 = vmatpush2.msra.mxu0 0.0
        %926 = vmatprep.subr.mxu0 0.0
        %927 = vmatpush2.msra.mxu0 0.0
        %928 = vmatprep.subr.mxu0 0.0
        %929 = vmatpush2.msra.mxu0 0.0
        %930 = vmatprep.subr.mxu0 0.0
        %931 = vmatpush2.msra.mxu0 0.0
        %932 = vmatprep.subr.mxu0 0.0
        %933 = vmatpush2.msra.mxu0 0.0
        %934 = vmatprep.subr.mxu0 0.0
        %935 = vmatpush2.msra.mxu0 0.0
        %936 = vmatprep.subr.mxu0 0.0
        %937 = vmatpush2.msra.mxu0 0.0
        %938 = vmatprep.subr.mxu0 0.0
        %939 = vmatpush2.msra.mxu0 0.0
        %940 = vmatprep.subr.mxu0 0.0
        %941 = vmatpush2.msra.mxu0 0.0
        %942 = vmatprep.subr.mxu0 0.0
        %943 = vmatpush2.msra.mxu0 0.0
        %944 = vmatprep.mubr.f32.mxu0 0.0
        %945 = vmatmul.mubr.f32.gmra.mxu0 %v878
        %v946 = vpop.f32.mrf.mxu0
        %v947 = vadd.f32 0.0, %v946
        %v948 = vpop.f32.mrf.mxu0
        %949 = vdwg.mxu0
        %950 = vrot.lane.b32.xlu0 %v372, 64
        %v951 = vpop.permute.xlu0 %950
        %v954 = vsel %vm375, %v721, 0
        %956 = vmatprep.subr.mxu0 0.0
        %957 = vmatpush1.msra.mxu0 0.0
        %958 = vmatprep.subr.mxu0 0.0
        %959 = vmatpush1.msra.mxu0 0.0
        %960 = vmatprep.subr.mxu0 0.0
        %961 = vmatpush1.msra.mxu0 0.0
        %962 = vmatprep.subr.mxu0 0.0
        %963 = vmatpush1.msra.mxu0 0.0
        %964 = vmatprep.subr.mxu0 0.0
        %965 = vmatpush1.msra.mxu0 0.0
        %966 = vmatprep.subr.mxu0 0.0
        %967 = vmatpush1.msra.mxu0 0.0
        %968 = vmatprep.subr.mxu0 0.0
        %969 = vmatpush1.msra.mxu0 0.0
        %970 = vmatprep.subr.mxu0 0.0
        %971 = vmatpush1.msra.mxu0 0.0
        %972 = vmatprep.subr.mxu0 0.0
        %973 = vmatpush1.msra.mxu0 0.0
        %974 = vmatprep.subr.mxu0 0.0
        %975 = vmatpush1.msra.mxu0 0.0
        %976 = vmatprep.subr.mxu0 0.0
        %977 = vmatpush1.msra.mxu0 0.0
        %978 = vmatprep.subr.mxu0 0.0
        %979 = vmatpush1.msra.mxu0 0.0
        %980 = vmatprep.subr.mxu0 0.0
        %981 = vmatpush1.msra.mxu0 0.0
        %982 = vmatprep.subr.mxu0 0.0
        %983 = vmatpush1.msra.mxu0 0.0
        %984 = vmatprep.subr.mxu0 0.0
        %985 = vmatpush1.msra.mxu0 0.0
        %986 = vmatprep.subr.mxu0 0.0
        %987 = vmatpush1.msra.mxu0 %v951
        %988 = vmatprep.subr.mxu0 0.0
        %989 = vmatpush2.msra.mxu0 0.0
        %990 = vmatprep.subr.mxu0 0.0
        %991 = vmatpush2.msra.mxu0 0.0
        %992 = vmatprep.subr.mxu0 0.0
        %993 = vmatpush2.msra.mxu0 0.0
        %994 = vmatprep.subr.mxu0 0.0
        %995 = vmatpush2.msra.mxu0 0.0
        %996 = vmatprep.subr.mxu0 0.0
        %997 = vmatpush2.msra.mxu0 0.0
        %998 = vmatprep.subr.mxu0 0.0
        %999 = vmatpush2.msra.mxu0 0.0
        %1000 = vmatprep.subr.mxu0 0.0
        %1001 = vmatpush2.msra.mxu0 0.0
        %1002 = vmatprep.subr.mxu0 0.0
        %1003 = vmatpush2.msra.mxu0 0.0
        %1004 = vmatprep.subr.mxu0 0.0
        %1005 = vmatpush2.msra.mxu0 0.0
        %1006 = vmatprep.subr.mxu0 0.0
        %1007 = vmatpush2.msra.mxu0 0.0
        %1008 = vmatprep.subr.mxu0 0.0
        %1009 = vmatpush2.msra.mxu0 0.0
        %1010 = vmatprep.subr.mxu0 0.0
        %1011 = vmatpush2.msra.mxu0 0.0
        %1012 = vmatprep.subr.mxu0 0.0
        %1013 = vmatpush2.msra.mxu0 0.0
        %1014 = vmatprep.subr.mxu0 0.0
        %1015 = vmatpush2.msra.mxu0 0.0
        %1016 = vmatprep.subr.mxu0 0.0
        %1017 = vmatpush2.msra.mxu0 0.0
        %1018 = vmatprep.subr.mxu0 0.0
        %1019 = vmatpush2.msra.mxu0 0.0
        %1020 = vmatprep.mubr.f32.mxu0 0.0
        %1021 = vmatmul.mubr.f32.gmra.mxu0 %v954
        %v1022 = vpop.f32.mrf.mxu0
        %v1023 = vadd.f32 0.0, %v1022
        %v1024 = vpop.f32.mrf.mxu0
        %1025 = vdwg.mxu0
        %1027 = vrot.lane.b32.xlu0 %v871, 8
        %v1028 = vpop.permute.xlu0 %1027
        %1031 = vrot.lane.b32.xlu0 %v947, 16
        %v1032 = vpop.permute.xlu0 %1031
        %1035 = vrot.lane.b32.xlu0 %v1023, 24
        %v1036 = vpop.permute.xlu0 %1035
        %v1038 = vsel %vm375, %v795, %v1028
        %vm1039 = vcmask 130048
        %v1040 = vsel %vm1039, %v1038, %v1032
        %vm1041 = vcmask 195584
        %v1042 = vsel %vm1041, %v1040, %v1036
        %v1043 = vpack.c.bf16 %v1042, %v1042
        %v1044 = vlaneseq
        %v1045 = vshrl.u32 %v1044, 7
        %v1046 = vsub.s32 1, %v1045
        %v1047 = vrot.slane %v304, %v1046
        %v1052 = vunpack.c.l.b16 %v288
        %v1053 = vunpack.c.l.b16 %v289
        %v1054 = vunpack.c.l.b16 %v290
        %v1055 = vunpack.c.l.b16 %v291
        %v1056 = vpack.c.b16 %v1053, %v1052
        %v1057 = vpack.c.b16 %v1055, %v1054
        %v1061 = vsel %vm322, %v1043, 0
        %1063 = vmatprep.subr.bf16.mxu0 0
        %1064 = vmatpush1.bf16.msra.mxu0 0
        %1065 = vmatprep.subr.bf16.mxu0 0
        %1066 = vmatpush1.bf16.msra.mxu0 0
        %1067 = vmatprep.subr.bf16.mxu0 0
        %1068 = vmatpush1.bf16.msra.mxu0 0
        %1069 = vmatprep.subr.bf16.mxu0 0
        %1070 = vmatpush1.bf16.msra.mxu0 0
        %1071 = vmatprep.subr.bf16.mxu0 0
        %1072 = vmatpush1.bf16.msra.mxu0 0
        %1073 = vmatprep.subr.bf16.mxu0 0
        %1074 = vmatpush1.bf16.msra.mxu0 0
        %1075 = vmatprep.subr.bf16.mxu0 0
        %1076 = vmatpush1.bf16.msra.mxu0 %v1057
        %1077 = vmatprep.subr.bf16.mxu0 0
        %1078 = vmatpush1.bf16.msra.mxu0 %v1056
        %1079 = vmatprep.subr.bf16.mxu0 0
        %1080 = vmatpush2.bf16.msra.mxu0 0
        %1081 = vmatprep.subr.bf16.mxu0 0
        %1082 = vmatpush2.bf16.msra.mxu0 0
        %1083 = vmatprep.subr.bf16.mxu0 0
        %1084 = vmatpush2.bf16.msra.mxu0 0
        %1085 = vmatprep.subr.bf16.mxu0 0
        %1086 = vmatpush2.bf16.msra.mxu0 0
        %1087 = vmatprep.subr.bf16.mxu0 0
        %1088 = vmatpush2.bf16.msra.mxu0 0
        %1089 = vmatprep.subr.bf16.mxu0 0
        %1090 = vmatpush2.bf16.msra.mxu0 0
        %1091 = vmatprep.subr.bf16.mxu0 0
        %1092 = vmatpush2.bf16.msra.mxu0 0
        %1093 = vmatprep.subr.bf16.mxu0 0
        %1094 = vmatpush2.bf16.msra.mxu0 0
        %1095 = vmatprep.mubr.bf16.mxu0 0
        %1096 = vmatmul.mubr.bf16.gmra.mxu0 %v1061
        %v1097 = vpop.f32.mrf.mxu0
        %v1098 = vadd.f32 %v1047, %v1097
        %v1099 = vpop.f32.mrf.mxu0
        %v1100 = vpop.f32.mrf.mxu0
        %v1101 = vpop.f32.mrf.mxu0
        %1102 = vdwg.mxu0
        %v1103 = vadd.f32 %v283, %v1098
        %v1104 = vsel %vm322, %v1103, 0.0
        %1105 = vadd.xlane.f32.xlu0 %v1104
        %v1106 = vpop.xlane.xlu0 %1105
        %v1107 = vrcp.pop 32.0
        %v1108 = vmul.f32 %v1106, %v1107
        %v1109 = vsub.f32 %v1103, %v1108
        %v1110 = vmul.f32 %v1109, %v1109
        %v1111 = vsel %vm322, %v1110, 0.0
        %1112 = vadd.xlane.f32.xlu0 %v1111
        %v1113 = vpop.xlane.xlu0 %1112
        %v1114 = vmul.f32 %v1113, %v1107
        %v1115 = vadd.f32 %v1114, 1e-05
        %v1116 = vrsqrt.pop %v1115
        %v1117 = vmul.f32 %v1109, %v1116
        %v1118 = vlaneseq
        %v1119 = vshrl.u32 %v1118, 7
        %v1120 = vsub.s32 4, %v1119
        %v1121 = vrot.slane %v304, %v1120
        %v1122 = vmul.f32 %v1117, %v1121
        %v1123 = vlaneseq
        %v1124 = vshrl.u32 %v1123, 7
        %v1125 = vsub.s32 5, %v1124
        %v1126 = vrot.slane %v304, %v1125
        %v1127 = vadd.f32 %v1122, %v1126
        %v1128 = vpack.c.bf16 %v1127, %v1127
        %v1129 = vlaneseq
        %v1130 = vshrl.u32 %v1129, 7
        %v1131 = vsub.s32 2, %v1130
        %v1132 = vrot.slane %v304, %v1131
        %v1137 = vunpack.c.l.b16 %v292
        %v1138 = vunpack.c.l.b16 %v293
        %v1139 = vunpack.c.l.b16 %v294
        %v1140 = vunpack.c.l.b16 %v295
        %v1141 = vpack.c.b16 %v1138, %v1137
        %v1142 = vpack.c.b16 %v1140, %v1139
        %v1146 = vsel %vm322, %v1128, 0
        %1148 = vmatprep.subr.bf16.mxu0 0
        %1149 = vmatpush1.bf16.msra.mxu0 0
        %1150 = vmatprep.subr.bf16.mxu0 0
        %1151 = vmatpush1.bf16.msra.mxu0 0
        %1152 = vmatprep.subr.bf16.mxu0 0
        %1153 = vmatpush1.bf16.msra.mxu0 0
        %1154 = vmatprep.subr.bf16.mxu0 0
        %1155 = vmatpush1.bf16.msra.mxu0 0
        %1156 = vmatprep.subr.bf16.mxu0 0
        %1157 = vmatpush1.bf16.msra.mxu0 0
        %1158 = vmatprep.subr.bf16.mxu0 0
        %1159 = vmatpush1.bf16.msra.mxu0 0
        %1160 = vmatprep.subr.bf16.mxu0 0
        %1161 = vmatpush1.bf16.msra.mxu0 %v1142
        %1162 = vmatprep.subr.bf16.mxu0 0
        %1163 = vmatpush1.bf16.msra.mxu0 %v1141
        %1164 = vmatprep.subr.bf16.mxu0 0
        %1165 = vmatpush2.bf16.msra.mxu0 0
        %1166 = vmatprep.subr.bf16.mxu0 0
        %1167 = vmatpush2.bf16.msra.mxu0 0
        %1168 = vmatprep.subr.bf16.mxu0 0
        %1169 = vmatpush2.bf16.msra.mxu0 0
        %1170 = vmatprep.subr.bf16.mxu0 0
        %1171 = vmatpush2.bf16.msra.mxu0 0
        %1172 = vmatprep.subr.bf16.mxu0 0
        %1173 = vmatpush2.bf16.msra.mxu0 0
        %1174 = vmatprep.subr.bf16.mxu0 0
        %1175 = vmatpush2.bf16.msra.mxu0 0
        %1176 = vmatprep.subr.bf16.mxu0 0
        %1177 = vmatpush2.bf16.msra.mxu0 0
        %1178 = vmatprep.subr.bf16.mxu0 0
        %1179 = vmatpush2.bf16.msra.mxu0 0
        %1180 = vmatprep.mubr.bf16.mxu0 0
        %1181 = vmatmul.mubr.bf16.gmra.mxu0 %v1146
        %v1182 = vpop.f32.mrf.mxu0
        %v1183 = vadd.f32 %v1132, %v1182
        %v1184 = vpop.f32.mrf.mxu0
        %v1185 = vpop.f32.mrf.mxu0
        %v1186 = vpop.f32.mrf.mxu0
        %1187 = vdwg.mxu0
        %v1188 = vmax.f32 %v1183, 0.0
        %v1189 = vpack.c.bf16 %v1188, %v1188
        %v1190 = vlaneseq
        %v1191 = vshrl.u32 %v1190, 7
        %v1192 = vsub.s32 3, %v1191
        %v1193 = vrot.slane %v304, %v1192
        %v1202 = vunpack.c.l.b16 %v296
        %v1203 = vunpack.c.l.b16 %v297
        %v1204 = vunpack.c.l.b16 %v298
        %v1205 = vunpack.c.l.b16 %v299
        %v1206 = vunpack.c.l.b16 %v300
        %v1207 = vunpack.c.l.b16 %v301
        %v1208 = vunpack.c.l.b16 %v302
        %v1209 = vunpack.c.l.b16 %v303
        %v1210 = vpack.c.b16 %v1203, %v1202
        %v1211 = vpack.c.b16 %v1205, %v1204
        %v1212 = vpack.c.b16 %v1207, %v1206
        %v1213 = vpack.c.b16 %v1209, %v1208
        %vm1218 = vcmask 523264
        %v1220 = vsel %vm1218, %v1189, 0
        %1222 = vmatprep.subr.bf16.mxu0 0
        %1223 = vmatpush1.bf16.msra.mxu0 0
        %1224 = vmatprep.subr.bf16.mxu0 0
        %1225 = vmatpush1.bf16.msra.mxu0 0
        %1226 = vmatprep.subr.bf16.mxu0 0
        %1227 = vmatpush1.bf16.msra.mxu0 0
        %1228 = vmatprep.subr.bf16.mxu0 0
        %1229 = vmatpush1.bf16.msra.mxu0 0
        %1230 = vmatprep.subr.bf16.mxu0 0
        %1231 = vmatpush1.bf16.msra.mxu0 %v1213
        %1232 = vmatprep.subr.bf16.mxu0 0
        %1233 = vmatpush1.bf16.msra.mxu0 %v1212
        %1234 = vmatprep.subr.bf16.mxu0 0
        %1235 = vmatpush1.bf16.msra.mxu0 %v1211
        %1236 = vmatprep.subr.bf16.mxu0 0
        %1237 = vmatpush1.bf16.msra.mxu0 %v1210
        %1238 = vmatprep.subr.bf16.mxu0 0
        %1239 = vmatpush2.bf16.msra.mxu0 0
        %1240 = vmatprep.subr.bf16.mxu0 0
        %1241 = vmatpush2.bf16.msra.mxu0 0
        %1242 = vmatprep.subr.bf16.mxu0 0
        %1243 = vmatpush2.bf16.msra.mxu0 0
        %1244 = vmatprep.subr.bf16.mxu0 0
        %1245 = vmatpush2.bf16.msra.mxu0 0
        %1246 = vmatprep.subr.bf16.mxu0 0
        %1247 = vmatpush2.bf16.msra.mxu0 0
        %1248 = vmatprep.subr.bf16.mxu0 0
        %1249 = vmatpush2.bf16.msra.mxu0 0
        %1250 = vmatprep.subr.bf16.mxu0 0
        %1251 = vmatpush2.bf16.msra.mxu0 0
        %1252 = vmatprep.subr.bf16.mxu0 0
        %1253 = vmatpush2.bf16.msra.mxu0 0
        %1254 = vmatprep.mubr.bf16.mxu0 0
        %1255 = vmatmul.mubr.bf16.gmra.mxu0 %v1220
        %v1256 = vpop.f32.mrf.mxu0
        %v1257 = vadd.f32 %v1193, %v1256
        %v1258 = vpop.f32.mrf.mxu0
        %v1259 = vpop.f32.mrf.mxu0
        %v1260 = vpop.f32.mrf.mxu0
        %1261 = vdwg.mxu0
        %v1262 = vadd.f32 %v1127, %v1257
        %v1263 = vsel %vm322, %v1262, 0.0
        %1264 = vadd.xlane.f32.xlu0 %v1263
        %v1265 = vpop.xlane.xlu0 %1264
        %v1266 = vmul.f32 %v1265, %v1107
        %v1267 = vsub.f32 %v1262, %v1266
        %v1268 = vmul.f32 %v1267, %v1267
        %v1269 = vsel %vm322, %v1268, 0.0
        %1270 = vadd.xlane.f32.xlu0 %v1269
        %v1271 = vpop.xlane.xlu0 %1270
        %v1272 = vmul.f32 %v1271, %v1107
        %v1273 = vadd.f32 %v1272, 1e-05
        %v1274 = vrsqrt.pop %v1273
        %v1275 = vmul.f32 %v1267, %v1274
        %v1276 = vlaneseq
        %v1277 = vshrl.u32 %v1276, 7
        %v1278 = vsub.s32 6, %v1277
        %v1279 = vrot.slane %v304, %v1278
        %v1280 = vmul.f32 %v1275, %v1279
        %v1281 = vlaneseq
        %v1282 = vshrl.u32 %v1281, 7
        %v1283 = vsub.s32 7, %v1282
        %v1284 = vrot.slane %v304, %v1283
        %v1285 = vadd.f32 %v1280, %v1284
        %1286 = vst.msk [vmem:[%s281] sm:$0xff] %vm322, %v1285
        %s1287 = scalar_lea.vmem %s1, 16
        %v1288 = vld [vmem:[%s1287] sm:$0xf]
        %v1289 = vld [vmem:[%s1287 + $0x4] sm:$0xf]
        %v1290 = vld [vmem:[%s1287 + $0x8] sm:$0xf]
        %v1291 = vld [vmem:[%s1287 + $0xc] sm:$0xf]
        %s1292 = scalar_lea.vmem %s2, 16
        %v1293 = vld [vmem:[%s1292] sm:$0xf]
        %v1294 = vld [vmem:[%s1292 + $0x4] sm:$0xf]
        %v1295 = vld [vmem:[%s1292 + $0x8] sm:$0xf]
        %v1296 = vld [vmem:[%s1292 + $0xc] sm:$0xf]
        %s1297 = scalar_lea.vmem %s3, 16
        %v1298 = vld [vmem:[%s1297] sm:$0xf]
        %v1299 = vld [vmem:[%s1297 + $0x4] sm:$0xf]
        %v1300 = vld [vmem:[%s1297 + $0x8] sm:$0xf]
        %v1301 = vld [vmem:[%s1297 + $0xc] sm:$0xf]
        %s1302 = scalar_lea.vmem %s4, 32
        %v1303 = vld [vmem:[%s1302] sm:$0xf]
        %v1304 = vld [vmem:[%s1302 + $0x4] sm:$0xf]
        %v1305 = vld [vmem:[%s1302 + $0x8] sm:$0xf]
        %v1306 = vld [vmem:[%s1302 + $0xc] sm:$0xf]
        %v1307 = vld [vmem:[%s1302 + $0x10] sm:$0xf]
        %v1308 = vld [vmem:[%s1302 + $0x14] sm:$0xf]
        %v1309 = vld [vmem:[%s1302 + $0x18] sm:$0xf]
        %v1310 = vld [vmem:[%s1302 + $0x1c] sm:$0xf]
        %s1311 = scalar_lea.vmem [#allocation5], 8
        %v1312 = vld [vmem:[%s1311] sm:$0xff]
        %v1313 = vpack.c.bf16 %v1285, %v1285
        %v1314 = vlaneseq
        %v1315 = vshrl.u32 %v1314, 7
        %v1316 = vsub.s32 0, %v1315
        %v1317 = vrot.slane %v1312, %v1316
        %v1322 = vunpack.c.l.b16 %v1288
        %v1323 = vunpack.c.l.b16 %v1289
        %v1324 = vunpack.c.l.b16 %v1290
        %v1325 = vunpack.c.l.b16 %v1291
        %v1326 = vpack.c.b16 %v1323, %v1322
        %v1327 = vpack.c.b16 %v1325, %v1324
        %v1331 = vsel %vm322, %v1313, 0
        %1333 = vmatprep.subr.bf16.mxu0 0
        %1334 = vmatpush1.bf16.msra.mxu0 0
        %1335 = vmatprep.subr.bf16.mxu0 0
        %1336 = vmatpush1.bf16.msra.mxu0 0
        %1337 = vmatprep.subr.bf16.mxu0 0
        %1338 = vmatpush1.bf16.msra.mxu0 0
        %1339 = vmatprep.subr.bf16.mxu0 0
        %1340 = vmatpush1.bf16.msra.mxu0 0
        %1341 = vmatprep.subr.bf16.mxu0 0
        %1342 = vmatpush1.bf16.msra.mxu0 0
        %1343 = vmatprep.subr.bf16.mxu0 0
        %1344 = vmatpush1.bf16.msra.mxu0 0
        %1345 = vmatprep.subr.bf16.mxu0 0
        %1346 = vmatpush1.bf16.msra.mxu0 %v1327
        %1347 = vmatprep.subr.bf16.mxu0 0
        %1348 = vmatpush1.bf16.msra.mxu0 %v1326
        %1349 = vmatprep.subr.bf16.mxu0 0
        %1350 = vmatpush2.bf16.msra.mxu0 0
        %1351 = vmatprep.subr.bf16.mxu0 0
        %1352 = vmatpush2.bf16.msra.mxu0 0
        %1353 = vmatprep.subr.bf16.mxu0 0
        %1354 = vmatpush2.bf16.msra.mxu0 0
        %1355 = vmatprep.subr.bf16.mxu0 0
        %1356 = vmatpush2.bf16.msra.mxu0 0
        %1357 = vmatprep.subr.bf16.mxu0 0
        %1358 = vmatpush2.bf16.msra.mxu0 0
        %1359 = vmatprep.subr.bf16.mxu0 0
        %1360 = vmatpush2.bf16.msra.mxu0 0
        %1361 = vmatprep.subr.bf16.mxu0 0
        %1362 = vmatpush2.bf16.msra.mxu0 0
        %1363 = vmatprep.subr.bf16.mxu0 0
        %1364 = vmatpush2.bf16.msra.mxu0 0
        %1365 = vmatprep.mubr.bf16.mxu0 0
        %1366 = vmatmul.mubr.bf16.gmra.mxu0 %v1331
        %v1367 = vpop.f32.mrf.mxu0
        %v1368 = vadd.f32 %v1317, %v1367
        %v1369 = vpop.f32.mrf.mxu0
        %v1370 = vpop.f32.mrf.mxu0
        %v1371 = vpop.f32.mrf.mxu0
        %1372 = vdwg.mxu0
        %1374 = vrot.lane.b32.xlu0 %v1368, 120
        %v1375 = vpop.permute.xlu0 %1374
        %1376 = vrot.lane.b32.xlu0 %v1368, 112
        %v1377 = vpop.permute.xlu0 %1376
        %1378 = vrot.lane.b32.xlu0 %v1368, 104
        %v1379 = vpop.permute.xlu0 %1378
        %1380 = vrot.lane.b32.xlu0 %v1368, 96
        %v1381 = vpop.permute.xlu0 %1380
        %v1382 = vsel %vm375, %v1368, 0
        %v1384 = vsel %vm375, %v1381, 0
        %1386 = vmatprep.subr.mxu0 0.0
        %1387 = vmatpush1.xpose.msra.mxu0 0.0
        %1388 = vmatprep.subr.mxu0 0.0
        %1389 = vmatpush1.xpose.msra.mxu0 0.0
        %1390 = vmatprep.subr.mxu0 0.0
        %1391 = vmatpush1.xpose.msra.mxu0 0.0
        %1392 = vmatprep.subr.mxu0 0.0
        %1393 = vmatpush1.xpose.msra.mxu0 0.0
        %1394 = vmatprep.subr.mxu0 0.0
        %1395 = vmatpush1.xpose.msra.mxu0 0.0
        %1396 = vmatprep.subr.mxu0 0.0
        %1397 = vmatpush1.xpose.msra.mxu0 0.0
        %1398 = vmatprep.subr.mxu0 0.0
        %1399 = vmatpush1.xpose.msra.mxu0 0.0
        %1400 = vmatprep.subr.mxu0 0.0
        %1401 = vmatpush1.xpose.msra.mxu0 0.0
        %1402 = vmatprep.subr.mxu0 0.0
        %1403 = vmatpush1.xpose.msra.mxu0 0.0
        %1404 = vmatprep.subr.mxu0 0.0
        %1405 = vmatpush1.xpose.msra.mxu0 0.0
        %1406 = vmatprep.subr.mxu0 0.0
        %1407 = vmatpush1.xpose.msra.mxu0 0.0
        %1408 = vmatprep.subr.mxu0 0.0
        %1409 = vmatpush1.xpose.msra.mxu0 0.0
        %1410 = vmatprep.subr.mxu0 0.0
        %1411 = vmatpush1.xpose.msra.mxu0 0.0
        %1412 = vmatprep.subr.mxu0 0.0
        %1413 = vmatpush1.xpose.msra.mxu0 0.0
        %1414 = vmatprep.subr.mxu0 0.0
        %1415 = vmatpush1.xpose.msra.mxu0 0.0
        %1416 = vmatprep.subr.mxu0 0.0
        %1417 = vmatpush1.xpose.msra.mxu0 %v1384
        %1418 = vmatprep.subr.mxu0 0.0
        %1419 = vmatpush2.xpose.msra.mxu0 0.0
        %1420 = vmatprep.subr.mxu0 0.0
        %1421 = vmatpush2.xpose.msra.mxu0 0.0
        %1422 = vmatprep.subr.mxu0 0.0
        %1423 = vmatpush2.xpose.msra.mxu0 0.0
        %1424 = vmatprep.subr.mxu0 0.0
        %1425 = vmatpush2.xpose.msra.mxu0 0.0
        %1426 = vmatprep.subr.mxu0 0.0
        %1427 = vmatpush2.xpose.msra.mxu0 0.0
        %1428 = vmatprep.subr.mxu0 0.0
        %1429 = vmatpush2.xpose.msra.mxu0 0.0
        %1430 = vmatprep.subr.mxu0 0.0
        %1431 = vmatpush2.xpose.msra.mxu0 0.0
        %1432 = vmatprep.subr.mxu0 0.0
        %1433 = vmatpush2.xpose.msra.mxu0 0.0
        %1434 = vmatprep.subr.mxu0 0.0
        %1435 = vmatpush2.xpose.msra.mxu0 0.0
        %1436 = vmatprep.subr.mxu0 0.0
        %1437 = vmatpush2.xpose.msra.mxu0 0.0
        %1438 = vmatprep.subr.mxu0 0.0
        %1439 = vmatpush2.xpose.msra.mxu0 0.0
        %1440 = vmatprep.subr.mxu0 0.0
        %1441 = vmatpush2.xpose.msra.mxu0 0.0
        %1442 = vmatprep.subr.mxu0 0.0
        %1443 = vmatpush2.xpose.msra.mxu0 0.0
        %1444 = vmatprep.subr.mxu0 0.0
        %1445 = vmatpush2.xpose.msra.mxu0 0.0
        %1446 = vmatprep.subr.mxu0 0.0
        %1447 = vmatpush2.xpose.msra.mxu0 0.0
        %1448 = vmatprep.subr.mxu0 0.0
        %1449 = vmatpush2.xpose.msra.mxu0 0.0
        %1450 = vmatprep.mubr.f32.mxu0 0.0
        %1451 = vmatmul.mubr.f32.gmra.mxu0 %v1382
        %v1452 = vpop.f32.mrf.mxu0
        %v1453 = vadd.f32 0.0, %v1452
        %v1454 = vpop.f32.mrf.mxu0
        %1455 = vdwg.mxu0
        %1456 = vrot.lane.b32.xlu0 %v1375, 96
        %v1457 = vpop.permute.xlu0 %1456
        %v1458 = vsel %vm375, %v1375, 0
        %v1460 = vsel %vm375, %v1457, 0
        %1462 = vmatprep.subr.mxu0 0.0
        %1463 = vmatpush1.xpose.msra.mxu0 0.0
        %1464 = vmatprep.subr.mxu0 0.0
        %1465 = vmatpush1.xpose.msra.mxu0 0.0
        %1466 = vmatprep.subr.mxu0 0.0
        %1467 = vmatpush1.xpose.msra.mxu0 0.0
        %1468 = vmatprep.subr.mxu0 0.0
        %1469 = vmatpush1.xpose.msra.mxu0 0.0
        %1470 = vmatprep.subr.mxu0 0.0
        %1471 = vmatpush1.xpose.msra.mxu0 0.0
        %1472 = vmatprep.subr.mxu0 0.0
        %1473 = vmatpush1.xpose.msra.mxu0 0.0
        %1474 = vmatprep.subr.mxu0 0.0
        %1475 = vmatpush1.xpose.msra.mxu0 0.0
        %1476 = vmatprep.subr.mxu0 0.0
        %1477 = vmatpush1.xpose.msra.mxu0 0.0
        %1478 = vmatprep.subr.mxu0 0.0
        %1479 = vmatpush1.xpose.msra.mxu0 0.0
        %1480 = vmatprep.subr.mxu0 0.0
        %1481 = vmatpush1.xpose.msra.mxu0 0.0
        %1482 = vmatprep.subr.mxu0 0.0
        %1483 = vmatpush1.xpose.msra.mxu0 0.0
        %1484 = vmatprep.subr.mxu0 0.0
        %1485 = vmatpush1.xpose.msra.mxu0 0.0
        %1486 = vmatprep.subr.mxu0 0.0
        %1487 = vmatpush1.xpose.msra.mxu0 0.0
        %1488 = vmatprep.subr.mxu0 0.0
        %1489 = vmatpush1.xpose.msra.mxu0 0.0
        %1490 = vmatprep.subr.mxu0 0.0
        %1491 = vmatpush1.xpose.msra.mxu0 0.0
        %1492 = vmatprep.subr.mxu0 0.0
        %1493 = vmatpush1.xpose.msra.mxu0 %v1460
        %1494 = vmatprep.subr.mxu0 0.0
        %1495 = vmatpush2.xpose.msra.mxu0 0.0
        %1496 = vmatprep.subr.mxu0 0.0
        %1497 = vmatpush2.xpose.msra.mxu0 0.0
        %1498 = vmatprep.subr.mxu0 0.0
        %1499 = vmatpush2.xpose.msra.mxu0 0.0
        %1500 = vmatprep.subr.mxu0 0.0
        %1501 = vmatpush2.xpose.msra.mxu0 0.0
        %1502 = vmatprep.subr.mxu0 0.0
        %1503 = vmatpush2.xpose.msra.mxu0 0.0
        %1504 = vmatprep.subr.mxu0 0.0
        %1505 = vmatpush2.xpose.msra.mxu0 0.0
        %1506 = vmatprep.subr.mxu0 0.0
        %1507 = vmatpush2.xpose.msra.mxu0 0.0
        %1508 = vmatprep.subr.mxu0 0.0
        %1509 = vmatpush2.xpose.msra.mxu0 0.0
        %1510 = vmatprep.subr.mxu0 0.0
        %1511 = vmatpush2.xpose.msra.mxu0 0.0
        %1512 = vmatprep.subr.mxu0 0.0
        %1513 = vmatpush2.xpose.msra.mxu0 0.0
        %1514 = vmatprep.subr.mxu0 0.0
        %1515 = vmatpush2.xpose.msra.mxu0 0.0
        %1516 = vmatprep.subr.mxu0 0.0
        %1517 = vmatpush2.xpose.msra.mxu0 0.0
        %1518 = vmatprep.subr.mxu0 0.0
        %1519 = vmatpush2.xpose.msra.mxu0 0.0
        %1520 = vmatprep.subr.mxu0 0.0
        %1521 = vmatpush2.xpose.msra.mxu0 0.0
        %1522 = vmatprep.subr.mxu0 0.0
        %1523 = vmatpush2.xpose.msra.mxu0 0.0
        %1524 = vmatprep.subr.mxu0 0.0
        %1525 = vmatpush2.xpose.msra.mxu0 0.0
        %1526 = vmatprep.mubr.f32.mxu0 0.0
        %1527 = vmatmul.mubr.f32.gmra.mxu0 %v1458
        %v1528 = vpop.f32.mrf.mxu0
        %v1529 = vadd.f32 0.0, %v1528
        %v1530 = vpop.f32.mrf.mxu0
        %1531 = vdwg.mxu0
        %1532 = vrot.lane.b32.xlu0 %v1377, 96
        %v1533 = vpop.permute.xlu0 %1532
        %v1534 = vsel %vm375, %v1377, 0
        %v1536 = vsel %vm375, %v1533, 0
        %1538 = vmatprep.subr.mxu0 0.0
        %1539 = vmatpush1.xpose.msra.mxu0 0.0
        %1540 = vmatprep.subr.mxu0 0.0
        %1541 = vmatpush1.xpose.msra.mxu0 0.0
        %1542 = vmatprep.subr.mxu0 0.0
        %1543 = vmatpush1.xpose.msra.mxu0 0.0
        %1544 = vmatprep.subr.mxu0 0.0
        %1545 = vmatpush1.xpose.msra.mxu0 0.0
        %1546 = vmatprep.subr.mxu0 0.0
        %1547 = vmatpush1.xpose.msra.mxu0 0.0
        %1548 = vmatprep.subr.mxu0 0.0
        %1549 = vmatpush1.xpose.msra.mxu0 0.0
        %1550 = vmatprep.subr.mxu0 0.0
        %1551 = vmatpush1.xpose.msra.mxu0 0.0
        %1552 = vmatprep.subr.mxu0 0.0
        %1553 = vmatpush1.xpose.msra.mxu0 0.0
        %1554 = vmatprep.subr.mxu0 0.0
        %1555 = vmatpush1.xpose.msra.mxu0 0.0
        %1556 = vmatprep.subr.mxu0 0.0
        %1557 = vmatpush1.xpose.msra.mxu0 0.0
        %1558 = vmatprep.subr.mxu0 0.0
        %1559 = vmatpush1.xpose.msra.mxu0 0.0
        %1560 = vmatprep.subr.mxu0 0.0
        %1561 = vmatpush1.xpose.msra.mxu0 0.0
        %1562 = vmatprep.subr.mxu0 0.0
        %1563 = vmatpush1.xpose.msra.mxu0 0.0
        %1564 = vmatprep.subr.mxu0 0.0
        %1565 = vmatpush1.xpose.msra.mxu0 0.0
        %1566 = vmatprep.subr.mxu0 0.0
        %1567 = vmatpush1.xpose.msra.mxu0 0.0
        %1568 = vmatprep.subr.mxu0 0.0
        %1569 = vmatpush1.xpose.msra.mxu0 %v1536
        %1570 = vmatprep.subr.mxu0 0.0
        %1571 = vmatpush2.xpose.msra.mxu0 0.0
        %1572 = vmatprep.subr.mxu0 0.0
        %1573 = vmatpush2.xpose.msra.mxu0 0.0
        %1574 = vmatprep.subr.mxu0 0.0
        %1575 = vmatpush2.xpose.msra.mxu0 0.0
        %1576 = vmatprep.subr.mxu0 0.0
        %1577 = vmatpush2.xpose.msra.mxu0 0.0
        %1578 = vmatprep.subr.mxu0 0.0
        %1579 = vmatpush2.xpose.msra.mxu0 0.0
        %1580 = vmatprep.subr.mxu0 0.0
        %1581 = vmatpush2.xpose.msra.mxu0 0.0
        %1582 = vmatprep.subr.mxu0 0.0
        %1583 = vmatpush2.xpose.msra.mxu0 0.0
        %1584 = vmatprep.subr.mxu0 0.0
        %1585 = vmatpush2.xpose.msra.mxu0 0.0
        %1586 = vmatprep.subr.mxu0 0.0
        %1587 = vmatpush2.xpose.msra.mxu0 0.0
        %1588 = vmatprep.subr.mxu0 0.0
        %1589 = vmatpush2.xpose.msra.mxu0 0.0
        %1590 = vmatprep.subr.mxu0 0.0
        %1591 = vmatpush2.xpose.msra.mxu0 0.0
        %1592 = vmatprep.subr.mxu0 0.0
        %1593 = vmatpush2.xpose.msra.mxu0 0.0
        %1594 = vmatprep.subr.mxu0 0.0
        %1595 = vmatpush2.xpose.msra.mxu0 0.0
        %1596 = vmatprep.subr.mxu0 0.0
        %1597 = vmatpush2.xpose.msra.mxu0 0.0
        %1598 = vmatprep.subr.mxu0 0.0
        %1599 = vmatpush2.xpose.msra.mxu0 0.0
        %1600 = vmatprep.subr.mxu0 0.0
        %1601 = vmatpush2.xpose.msra.mxu0 0.0
        %1602 = vmatprep.mubr.f32.mxu0 0.0
        %1603 = vmatmul.mubr.f32.gmra.mxu0 %v1534
        %v1604 = vpop.f32.mrf.mxu0
        %v1605 = vadd.f32 0.0, %v1604
        %v1606 = vpop.f32.mrf.mxu0
        %1607 = vdwg.mxu0
        %1608 = vrot.lane.b32.xlu0 %v1379, 96
        %v1609 = vpop.permute.xlu0 %1608
        %v1610 = vsel %vm375, %v1379, 0
        %v1612 = vsel %vm375, %v1609, 0
        %1614 = vmatprep.subr.mxu0 0.0
        %1615 = vmatpush1.xpose.msra.mxu0 0.0
        %1616 = vmatprep.subr.mxu0 0.0
        %1617 = vmatpush1.xpose.msra.mxu0 0.0
        %1618 = vmatprep.subr.mxu0 0.0
        %1619 = vmatpush1.xpose.msra.mxu0 0.0
        %1620 = vmatprep.subr.mxu0 0.0
        %1621 = vmatpush1.xpose.msra.mxu0 0.0
        %1622 = vmatprep.subr.mxu0 0.0
        %1623 = vmatpush1.xpose.msra.mxu0 0.0
        %1624 = vmatprep.subr.mxu0 0.0
        %1625 = vmatpush1.xpose.msra.mxu0 0.0
        %1626 = vmatprep.subr.mxu0 0.0
        %1627 = vmatpush1.xpose.msra.mxu0 0.0
        %1628 = vmatprep.subr.mxu0 0.0
        %1629 = vmatpush1.xpose.msra.mxu0 0.0
        %1630 = vmatprep.subr.mxu0 0.0
        %1631 = vmatpush1.xpose.msra.mxu0 0.0
        %1632 = vmatprep.subr.mxu0 0.0
        %1633 = vmatpush1.xpose.msra.mxu0 0.0
        %1634 = vmatprep.subr.mxu0 0.0
        %1635 = vmatpush1.xpose.msra.mxu0 0.0
        %1636 = vmatprep.subr.mxu0 0.0
        %1637 = vmatpush1.xpose.msra.mxu0 0.0
        %1638 = vmatprep.subr.mxu0 0.0
        %1639 = vmatpush1.xpose.msra.mxu0 0.0
        %1640 = vmatprep.subr.mxu0 0.0
        %1641 = vmatpush1.xpose.msra.mxu0 0.0
        %1642 = vmatprep.subr.mxu0 0.0
        %1643 = vmatpush1.xpose.msra.mxu0 0.0
        %1644 = vmatprep.subr.mxu0 0.0
        %1645 = vmatpush1.xpose.msra.mxu0 %v1612
        %1646 = vmatprep.subr.mxu0 0.0
        %1647 = vmatpush2.xpose.msra.mxu0 0.0
        %1648 = vmatprep.subr.mxu0 0.0
        %1649 = vmatpush2.xpose.msra.mxu0 0.0
        %1650 = vmatprep.subr.mxu0 0.0
        %1651 = vmatpush2.xpose.msra.mxu0 0.0
        %1652 = vmatprep.subr.mxu0 0.0
        %1653 = vmatpush2.xpose.msra.mxu0 0.0
        %1654 = vmatprep.subr.mxu0 0.0
        %1655 = vmatpush2.xpose.msra.mxu0 0.0
        %1656 = vmatprep.subr.mxu0 0.0
        %1657 = vmatpush2.xpose.msra.mxu0 0.0
        %1658 = vmatprep.subr.mxu0 0.0
        %1659 = vmatpush2.xpose.msra.mxu0 0.0
        %1660 = vmatprep.subr.mxu0 0.0
        %1661 = vmatpush2.xpose.msra.mxu0 0.0
        %1662 = vmatprep.subr.mxu0 0.0
        %1663 = vmatpush2.xpose.msra.mxu0 0.0
        %1664 = vmatprep.subr.mxu0 0.0
        %1665 = vmatpush2.xpose.msra.mxu0 0.0
        %1666 = vmatprep.subr.mxu0 0.0
        %1667 = vmatpush2.xpose.msra.mxu0 0.0
        %1668 = vmatprep.subr.mxu0 0.0
        %1669 = vmatpush2.xpose.msra.mxu0 0.0
        %1670 = vmatprep.subr.mxu0 0.0
        %1671 = vmatpush2.xpose.msra.mxu0 0.0
        %1672 = vmatprep.subr.mxu0 0.0
        %1673 = vmatpush2.xpose.msra.mxu0 0.0
        %1674 = vmatprep.subr.mxu0 0.0
        %1675 = vmatpush2.xpose.msra.mxu0 0.0
        %1676 = vmatprep.subr.mxu0 0.0
        %1677 = vmatpush2.xpose.msra.mxu0 0.0
        %1678 = vmatprep.mubr.f32.mxu0 0.0
        %1679 = vmatmul.mubr.f32.gmra.mxu0 %v1610
        %v1680 = vpop.f32.mrf.mxu0
        %v1681 = vadd.f32 0.0, %v1680
        %v1682 = vpop.f32.mrf.mxu0
        %1683 = vdwg.mxu0
        %v1684 = vsel %vm375, %v1453, -inf
        %1685 = vmax.xlane.f32.xlu0 %v1684
        %v1686 = vpop.xlane.xlu0 %1685
        %v1687 = vsel %vm375, %v1529, -inf
        %1688 = vmax.xlane.f32.xlu0 %v1687
        %v1689 = vpop.xlane.xlu0 %1688
        %v1690 = vsel %vm375, %v1605, -inf
        %1691 = vmax.xlane.f32.xlu0 %v1690
        %v1692 = vpop.xlane.xlu0 %1691
        %v1693 = vsel %vm375, %v1681, -inf
        %1694 = vmax.xlane.f32.xlu0 %v1693
        %v1695 = vpop.xlane.xlu0 %1694
        %v1696 = vsub.f32 %v1453, %v1686
        %v1697 = vsub.f32 %v1529, %v1689
        %v1698 = vsub.f32 %v1605, %v1692
        %v1699 = vsub.f32 %v1681, %v1695
        %v1700 = vmul.f32 %v1696, 1.442695
        %v1701 = vpow.pop %v1700
        %v1702 = vmul.f32 %v1697, 1.442695
        %v1703 = vpow.pop %v1702
        %v1704 = vmul.f32 %v1698, 1.442695
        %v1705 = vpow.pop %v1704
        %v1706 = vmul.f32 %v1699, 1.442695
        %v1707 = vpow.pop %v1706
        %v1708 = vsel %vm375, %v1701, 0.0
        %1709 = vadd.xlane.f32.xlu0 %v1708
        %v1710 = vpop.xlane.xlu0 %1709
        %v1711 = vsel %vm375, %v1703, 0.0
        %1712 = vadd.xlane.f32.xlu0 %v1711
        %v1713 = vpop.xlane.xlu0 %1712
        %v1714 = vsel %vm375, %v1705, 0.0
        %1715 = vadd.xlane.f32.xlu0 %v1714
        %v1716 = vpop.xlane.xlu0 %1715
        %v1717 = vsel %vm375, %v1707, 0.0
        %1718 = vadd.xlane.f32.xlu0 %v1717
        %v1719 = vpop.xlane.xlu0 %1718
        %v1720 = vrcp.pop %v1710
        %v1721 = vrcp.pop %v1713
        %v1722 = vrcp.pop %v1716
        %v1723 = vrcp.pop %v1719
        %v1724 = vmul.f32 %v1701, %v1720
        %v1725 = vmul.f32 %v1703, %v1721
        %v1726 = vmul.f32 %v1705, %v1722
        %v1727 = vmul.f32 %v1707, %v1723
        %1728 = vrot.lane.b32.xlu0 %v1368, 64
        %v1729 = vpop.permute.xlu0 %1728
        %v1732 = vsel %vm375, %v1724, 0
        %1734 = vmatprep.subr.mxu0 0.0
        %1735 = vmatpush1.msra.mxu0 0.0
        %1736 = vmatprep.subr.mxu0 0.0
        %1737 = vmatpush1.msra.mxu0 0.0
        %1738 = vmatprep.subr.mxu0 0.0
        %1739 = vmatpush1.msra.mxu0 0.0
        %1740 = vmatprep.subr.mxu0 0.0
        %1741 = vmatpush1.msra.mxu0 0.0
        %1742 = vmatprep.subr.mxu0 0.0
        %1743 = vmatpush1.msra.mxu0 0.0
        %1744 = vmatprep.subr.mxu0 0.0
        %1745 = vmatpush1.msra.mxu0 0.0
        %1746 = vmatprep.subr.mxu0 0.0
        %1747 = vmatpush1.msra.mxu0 0.0
        %1748 = vmatprep.subr.mxu0 0.0
        %1749 = vmatpush1.msra.mxu0 0.0
        %1750 = vmatprep.subr.mxu0 0.0
        %1751 = vmatpush1.msra.mxu0 0.0
        %1752 = vmatprep.subr.mxu0 0.0
        %1753 = vmatpush1.msra.mxu0 0.0
        %1754 = vmatprep.subr.mxu0 0.0
        %1755 = vmatpush1.msra.mxu0 0.0
        %1756 = vmatprep.subr.mxu0 0.0
        %1757 = vmatpush1.msra.mxu0 0.0
        %1758 = vmatprep.subr.mxu0 0.0
        %1759 = vmatpush1.msra.mxu0 0.0
        %1760 = vmatprep.subr.mxu0 0.0
        %1761 = vmatpush1.msra.mxu0 0.0
        %1762 = vmatprep.subr.mxu0 0.0
        %1763 = vmatpush1.msra.mxu0 0.0
        %1764 = vmatprep.subr.mxu0 0.0
        %1765 = vmatpush1.msra.mxu0 %v1729
        %1766 = vmatprep.subr.mxu0 0.0
        %1767 = vmatpush2.msra.mxu0 0.0
        %1768 = vmatprep.subr.mxu0 0.0
        %1769 = vmatpush2.msra.mxu0 0.0
        %1770 = vmatprep.subr.mxu0 0.0
        %1771 = vmatpush2.msra.mxu0 0.0
        %1772 = vmatprep.subr.mxu0 0.0
        %1773 = vmatpush2.msra.mxu0 0.0
        %1774 = vmatprep.subr.mxu0 0.0
        %1775 = vmatpush2.msra.mxu0 0.0
        %1776 = vmatprep.subr.mxu0 0.0
        %1777 = vmatpush2.msra.mxu0 0.0
        %1778 = vmatprep.subr.mxu0 0.0
        %1779 = vmatpush2.msra.mxu0 0.0
        %1780 = vmatprep.subr.mxu0 0.0
        %1781 = vmatpush2.msra.mxu0 0.0
        %1782 = vmatprep.subr.mxu0 0.0
        %1783 = vmatpush2.msra.mxu0 0.0
        %1784 = vmatprep.subr.mxu0 0.0
        %1785 = vmatpush2.msra.mxu0 0.0
        %1786 = vmatprep.subr.mxu0 0.0
        %1787 = vmatpush2.msra.mxu0 0.0
        %1788 = vmatprep.subr.mxu0 0.0
        %1789 = vmatpush2.msra.mxu0 0.0
        %1790 = vmatprep.subr.mxu0 0.0
        %1791 = vmatpush2.msra.mxu0 0.0
        %1792 = vmatprep.subr.mxu0 0.0
        %1793 = vmatpush2.msra.mxu0 0.0
        %1794 = vmatprep.subr.mxu0 0.0
        %1795 = vmatpush2.msra.mxu0 0.0
        %1796 = vmatprep.subr.mxu0 0.0
        %1797 = vmatpush2.msra.mxu0 0.0
        %1798 = vmatprep.mubr.f32.mxu0 0.0
        %1799 = vmatmul.mubr.f32.gmra.mxu0 %v1732
        %v1800 = vpop.f32.mrf.mxu0
        %v1801 = vadd.f32 0.0, %v1800
        %v1802 = vpop.f32.mrf.mxu0
        %1803 = vdwg.mxu0
        %1804 = vrot.lane.b32.xlu0 %v1375, 64
        %v1805 = vpop.permute.xlu0 %1804
        %v1808 = vsel %vm375, %v1725, 0
        %1810 = vmatprep.subr.mxu0 0.0
        %1811 = vmatpush1.msra.mxu0 0.0
        %1812 = vmatprep.subr.mxu0 0.0
        %1813 = vmatpush1.msra.mxu0 0.0
        %1814 = vmatprep.subr.mxu0 0.0
        %1815 = vmatpush1.msra.mxu0 0.0
        %1816 = vmatprep.subr.mxu0 0.0
        %1817 = vmatpush1.msra.mxu0 0.0
        %1818 = vmatprep.subr.mxu0 0.0
        %1819 = vmatpush1.msra.mxu0 0.0
        %1820 = vmatprep.subr.mxu0 0.0
        %1821 = vmatpush1.msra.mxu0 0.0
        %1822 = vmatprep.subr.mxu0 0.0
        %1823 = vmatpush1.msra.mxu0 0.0
        %1824 = vmatprep.subr.mxu0 0.0
        %1825 = vmatpush1.msra.mxu0 0.0
        %1826 = vmatprep.subr.mxu0 0.0
        %1827 = vmatpush1.msra.mxu0 0.0
        %1828 = vmatprep.subr.mxu0 0.0
        %1829 = vmatpush1.msra.mxu0 0.0
        %1830 = vmatprep.subr.mxu0 0.0
        %1831 = vmatpush1.msra.mxu0 0.0
        %1832 = vmatprep.subr.mxu0 0.0
        %1833 = vmatpush1.msra.mxu0 0.0
        %1834 = vmatprep.subr.mxu0 0.0
        %1835 = vmatpush1.msra.mxu0 0.0
        %1836 = vmatprep.subr.mxu0 0.0
        %1837 = vmatpush1.msra.mxu0 0.0
        %1838 = vmatprep.subr.mxu0 0.0
        %1839 = vmatpush1.msra.mxu0 0.0
        %1840 = vmatprep.subr.mxu0 0.0
        %1841 = vmatpush1.msra.mxu0 %v1805
        %1842 = vmatprep.subr.mxu0 0.0
        %1843 = vmatpush2.msra.mxu0 0.0
        %1844 = vmatprep.subr.mxu0 0.0
        %1845 = vmatpush2.msra.mxu0 0.0
        %1846 = vmatprep.subr.mxu0 0.0
        %1847 = vmatpush2.msra.mxu0 0.0
        %1848 = vmatprep.subr.mxu0 0.0
        %1849 = vmatpush2.msra.mxu0 0.0
        %1850 = vmatprep.subr.mxu0 0.0
        %1851 = vmatpush2.msra.mxu0 0.0
        %1852 = vmatprep.subr.mxu0 0.0
        %1853 = vmatpush2.msra.mxu0 0.0
        %1854 = vmatprep.subr.mxu0 0.0
        %1855 = vmatpush2.msra.mxu0 0.0
        %1856 = vmatprep.subr.mxu0 0.0
        %1857 = vmatpush2.msra.mxu0 0.0
        %1858 = vmatprep.subr.mxu0 0.0
        %1859 = vmatpush2.msra.mxu0 0.0
        %1860 = vmatprep.subr.mxu0 0.0
        %1861 = vmatpush2.msra.mxu0 0.0
        %1862 = vmatprep.subr.mxu0 0.0
        %1863 = vmatpush2.msra.mxu0 0.0
        %1864 = vmatprep.subr.mxu0 0.0
        %1865 = vmatpush2.msra.mxu0 0.0
        %1866 = vmatprep.subr.mxu0 0.0
        %1867 = vmatpush2.msra.mxu0 0.0
        %1868 = vmatprep.subr.mxu0 0.0
        %1869 = vmatpush2.msra.mxu0 0.0
        %1870 = vmatprep.subr.mxu0 0.0
        %1871 = vmatpush2.msra.mxu0 0.0
        %1872 = vmatprep.subr.mxu0 0.0
        %1873 = vmatpush2.msra.mxu0 0.0
        %1874 = vmatprep.mubr.f32.mxu0 0.0
        %1875 = vmatmul.mubr.f32.gmra.mxu0 %v1808
        %v1876 = vpop.f32.mrf.mxu0
        %v1877 = vadd.f32 0.0, %v1876
        %v1878 = vpop.f32.mrf.mxu0
        %1879 = vdwg.mxu0
        %1880 = vrot.lane.b32.xlu0 %v1377, 64
        %v1881 = vpop.permute.xlu0 %1880
        %v1884 = vsel %vm375, %v1726, 0
        %1886 = vmatprep.subr.mxu0 0.0
        %1887 = vmatpush1.msra.mxu0 0.0
        %1888 = vmatprep.subr.mxu0 0.0
        %1889 = vmatpush1.msra.mxu0 0.0
        %1890 = vmatprep.subr.mxu0 0.0
        %1891 = vmatpush1.msra.mxu0 0.0
        %1892 = vmatprep.subr.mxu0 0.0
        %1893 = vmatpush1.msra.mxu0 0.0
        %1894 = vmatprep.subr.mxu0 0.0
        %1895 = vmatpush1.msra.mxu0 0.0
        %1896 = vmatprep.subr.mxu0 0.0
        %1897 = vmatpush1.msra.mxu0 0.0
        %1898 = vmatprep.subr.mxu0 0.0
        %1899 = vmatpush1.msra.mxu0 0.0
        %1900 = vmatprep.subr.mxu0 0.0
        %1901 = vmatpush1.msra.mxu0 0.0
        %1902 = vmatprep.subr.mxu0 0.0
        %1903 = vmatpush1.msra.mxu0 0.0
        %1904 = vmatprep.subr.mxu0 0.0
        %1905 = vmatpush1.msra.mxu0 0.0
        %1906 = vmatprep.subr.mxu0 0.0
        %1907 = vmatpush1.msra.mxu0 0.0
        %1908 = vmatprep.subr.mxu0 0.0
        %1909 = vmatpush1.msra.mxu0 0.0
        %1910 = vmatprep.subr.mxu0 0.0
        %1911 = vmatpush1.msra.mxu0 0.0
        %1912 = vmatprep.subr.mxu0 0.0
        %1913 = vmatpush1.msra.mxu0 0.0
        %1914 = vmatprep.subr.mxu0 0.0
        %1915 = vmatpush1.msra.mxu0 0.0
        %1916 = vmatprep.subr.mxu0 0.0
        %1917 = vmatpush1.msra.mxu0 %v1881
        %1918 = vmatprep.subr.mxu0 0.0
        %1919 = vmatpush2.msra.mxu0 0.0
        %1920 = vmatprep.subr.mxu0 0.0
        %1921 = vmatpush2.msra.mxu0 0.0
        %1922 = vmatprep.subr.mxu0 0.0
        %1923 = vmatpush2.msra.mxu0 0.0
        %1924 = vmatprep.subr.mxu0 0.0
        %1925 = vmatpush2.msra.mxu0 0.0
        %1926 = vmatprep.subr.mxu0 0.0
        %1927 = vmatpush2.msra.mxu0 0.0
        %1928 = vmatprep.subr.mxu0 0.0
        %1929 = vmatpush2.msra.mxu0 0.0
        %1930 = vmatprep.subr.mxu0 0.0
        %1931 = vmatpush2.msra.mxu0 0.0
        %1932 = vmatprep.subr.mxu0 0.0
        %1933 = vmatpush2.msra.mxu0 0.0
        %1934 = vmatprep.subr.mxu0 0.0
        %1935 = vmatpush2.msra.mxu0 0.0
        %1936 = vmatprep.subr.mxu0 0.0
        %1937 = vmatpush2.msra.mxu0 0.0
        %1938 = vmatprep.subr.mxu0 0.0
        %1939 = vmatpush2.msra.mxu0 0.0
        %1940 = vmatprep.subr.mxu0 0.0
        %1941 = vmatpush2.msra.mxu0 0.0
        %1942 = vmatprep.subr.mxu0 0.0
        %1943 = vmatpush2.msra.mxu0 0.0
        %1944 = vmatprep.subr.mxu0 0.0
        %1945 = vmatpush2.msra.mxu0 0.0
        %1946 = vmatprep.subr.mxu0 0.0
        %1947 = vmatpush2.msra.mxu0 0.0
        %1948 = vmatprep.subr.mxu0 0.0
        %1949 = vmatpush2.msra.mxu0 0.0
        %1950 = vmatprep.mubr.f32.mxu0 0.0
        %1951 = vmatmul.mubr.f32.gmra.mxu0 %v1884
        %v1952 = vpop.f32.mrf.mxu0
        %v1953 = vadd.f32 0.0, %v1952
        %v1954 = vpop.f32.mrf.mxu0
        %1955 = vdwg.mxu0
        %1956 = vrot.lane.b32.xlu0 %v1379, 64
        %v1957 = vpop.permute.xlu0 %1956
        %v1960 = vsel %vm375, %v1727, 0
        %1962 = vmatprep.subr.mxu0 0.0
        %1963 = vmatpush1.msra.mxu0 0.0
        %1964 = vmatprep.subr.mxu0 0.0
        %1965 = vmatpush1.msra.mxu0 0.0
        %1966 = vmatprep.subr.mxu0 0.0
        %1967 = vmatpush1.msra.mxu0 0.0
        %1968 = vmatprep.subr.mxu0 0.0
        %1969 = vmatpush1.msra.mxu0 0.0
        %1970 = vmatprep.subr.mxu0 0.0
        %1971 = vmatpush1.msra.mxu0 0.0
        %1972 = vmatprep.subr.mxu0 0.0
        %1973 = vmatpush1.msra.mxu0 0.0
        %1974 = vmatprep.subr.mxu0 0.0
        %1975 = vmatpush1.msra.mxu0 0.0
        %1976 = vmatprep.subr.mxu0 0.0
        %1977 = vmatpush1.msra.mxu0 0.0
        %1978 = vmatprep.subr.mxu0 0.0
        %1979 = vmatpush1.msra.mxu0 0.0
        %1980 = vmatprep.subr.mxu0 0.0
        %1981 = vmatpush1.msra.mxu0 0.0
        %1982 = vmatprep.subr.mxu0 0.0
        %1983 = vmatpush1.msra.mxu0 0.0
        %1984 = vmatprep.subr.mxu0 0.0
        %1985 = vmatpush1.msra.mxu0 0.0
        %1986 = vmatprep.subr.mxu0 0.0
        %1987 = vmatpush1.msra.mxu0 0.0
        %1988 = vmatprep.subr.mxu0 0.0
        %1989 = vmatpush1.msra.mxu0 0.0
        %1990 = vmatprep.subr.mxu0 0.0
        %1991 = vmatpush1.msra.mxu0 0.0
        %1992 = vmatprep.subr.mxu0 0.0
        %1993 = vmatpush1.msra.mxu0 %v1957
        %1994 = vmatprep.subr.mxu0 0.0
        %1995 = vmatpush2.msra.mxu0 0.0
        %1996 = vmatprep.subr.mxu0 0.0
        %1997 = vmatpush2.msra.mxu0 0.0
        %1998 = vmatprep.subr.mxu0 0.0
        %1999 = vmatpush2.msra.mxu0 0.0
        %2000 = vmatprep.subr.mxu0 0.0
        %2001 = vmatpush2.msra.mxu0 0.0
        %2002 = vmatprep.subr.mxu0 0.0
        %2003 = vmatpush2.msra.mxu0 0.0
        %2004 = vmatprep.subr.mxu0 0.0
        %2005 = vmatpush2.msra.mxu0 0.0
        %2006 = vmatprep.subr.mxu0 0.0
        %2007 = vmatpush2.msra.mxu0 0.0
        %2008 = vmatprep.subr.mxu0 0.0
        %2009 = vmatpush2.msra.mxu0 0.0
        %2010 = vmatprep.subr.mxu0 0.0
        %2011 = vmatpush2.msra.mxu0 0.0
        %2012 = vmatprep.subr.mxu0 0.0
        %2013 = vmatpush2.msra.mxu0 0.0
        %2014 = vmatprep.subr.mxu0 0.0
        %2015 = vmatpush2.msra.mxu0 0.0
        %2016 = vmatprep.subr.mxu0 0.0
        %2017 = vmatpush2.msra.mxu0 0.0
        %2018 = vmatprep.subr.mxu0 0.0
        %2019 = vmatpush2.msra.mxu0 0.0
        %2020 = vmatprep.subr.mxu0 0.0
        %2021 = vmatpush2.msra.mxu0 0.0
        %2022 = vmatprep.subr.mxu0 0.0
        %2023 = vmatpush2.msra.mxu0 0.0
        %2024 = vmatprep.subr.mxu0 0.0
        %2025 = vmatpush2.msra.mxu0 0.0
        %2026 = vmatprep.mubr.f32.mxu0 0.0
        %2027 = vmatmul.mubr.f32.gmra.mxu0 %v1960
        %v2028 = vpop.f32.mrf.mxu0
        %v2029 = vadd.f32 0.0, %v2028
        %v2030 = vpop.f32.mrf.mxu0
        %2031 = vdwg.mxu0
        %2033 = vrot.lane.b32.xlu0 %v1877, 8
        %v2034 = vpop.permute.xlu0 %2033
        %2037 = vrot.lane.b32.xlu0 %v1953, 16
        %v2038 = vpop.permute.xlu0 %2037
        %2041 = vrot.lane.b32.xlu0 %v2029, 24
        %v2042 = vpop.permute.xlu0 %2041
        %v2044 = vsel %vm375, %v1801, %v2034
        %v2045 = vsel %vm1039, %v2044, %v2038
        %v2046 = vsel %vm1041, %v2045, %v2042
        %v2047 = vpack.c.bf16 %v2046, %v2046
        %v2048 = vlaneseq
        %v2049 = vshrl.u32 %v2048, 7
        %v2050 = vsub.s32 1, %v2049
        %v2051 = vrot.slane %v1312, %v2050
        %v2056 = vunpack.c.l.b16 %v1293
        %v2057 = vunpack.c.l.b16 %v1294
        %v2058 = vunpack.c.l.b16 %v1295
        %v2059 = vunpack.c.l.b16 %v1296
        %v2060 = vpack.c.b16 %v2057, %v2056
        %v2061 = vpack.c.b16 %v2059, %v2058
        %v2065 = vsel %vm322, %v2047, 0
        %2067 = vmatprep.subr.bf16.mxu0 0
        %2068 = vmatpush1.bf16.msra.mxu0 0
        %2069 = vmatprep.subr.bf16.mxu0 0
        %2070 = vmatpush1.bf16.msra.mxu0 0
        %2071 = vmatprep.subr.bf16.mxu0 0
        %2072 = vmatpush1.bf16.msra.mxu0 0
        %2073 = vmatprep.subr.bf16.mxu0 0
        %2074 = vmatpush1.bf16.msra.mxu0 0
        %2075 = vmatprep.subr.bf16.mxu0 0
        %2076 = vmatpush1.bf16.msra.mxu0 0
        %2077 = vmatprep.subr.bf16.mxu0 0
        %2078 = vmatpush1.bf16.msra.mxu0 0
        %2079 = vmatprep.subr.bf16.mxu0 0
        %2080 = vmatpush1.bf16.msra.mxu0 %v2061
        %2081 = vmatprep.subr.bf16.mxu0 0
        %2082 = vmatpush1.bf16.msra.mxu0 %v2060
        %2083 = vmatprep.subr.bf16.mxu0 0
        %2084 = vmatpush2.bf16.msra.mxu0 0
        %2085 = vmatprep.subr.bf16.mxu0 0
        %2086 = vmatpush2.bf16.msra.mxu0 0
        %2087 = vmatprep.subr.bf16.mxu0 0
        %2088 = vmatpush2.bf16.msra.mxu0 0
        %2089 = vmatprep.subr.bf16.mxu0 0
        %2090 = vmatpush2.bf16.msra.mxu0 0
        %2091 = vmatprep.subr.bf16.mxu0 0
        %2092 = vmatpush2.bf16.msra.mxu0 0
        %2093 = vmatprep.subr.bf16.mxu0 0
        %2094 = vmatpush2.bf16.msra.mxu0 0
        %2095 = vmatprep.subr.bf16.mxu0 0
        %2096 = vmatpush2.bf16.msra.mxu0 0
        %2097 = vmatprep.subr.bf16.mxu0 0
        %2098 = vmatpush2.bf16.msra.mxu0 0
        %2099 = vmatprep.mubr.bf16.mxu0 0
        %2100 = vmatmul.mubr.bf16.gmra.mxu0 %v2065
        %v2101 = vpop.f32.mrf.mxu0
        %v2102 = vadd.f32 %v2051, %v2101
        %v2103 = vpop.f32.mrf.mxu0
        %v2104 = vpop.f32.mrf.mxu0
        %v2105 = vpop.f32.mrf.mxu0
        %2106 = vdwg.mxu0
        %v2107 = vadd.f32 %v1285, %v2102
        %v2108 = vsel %vm322, %v2107, 0.0
        %2109 = vadd.xlane.f32.xlu0 %v2108
        %v2110 = vpop.xlane.xlu0 %2109
        %v2111 = vmul.f32 %v2110, %v1107
        %v2112 = vsub.f32 %v2107, %v2111
        %v2113 = vmul.f32 %v2112, %v2112
        %v2114 = vsel %vm322, %v2113, 0.0
        %2115 = vadd.xlane.f32.xlu0 %v2114
        %v2116 = vpop.xlane.xlu0 %2115
        %v2117 = vmul.f32 %v2116, %v1107
        %v2118 = vadd.f32 %v2117, 1e-05
        %v2119 = vrsqrt.pop %v2118
        %v2120 = vmul.f32 %v2112, %v2119
        %v2121 = vlaneseq
        %v2122 = vshrl.u32 %v2121, 7
        %v2123 = vsub.s32 4, %v2122
        %v2124 = vrot.slane %v1312, %v2123
        %v2125 = vmul.f32 %v2120, %v2124
        %v2126 = vlaneseq
        %v2127 = vshrl.u32 %v2126, 7
        %v2128 = vsub.s32 5, %v2127
        %v2129 = vrot.slane %v1312, %v2128
        %v2130 = vadd.f32 %v2125, %v2129
        %v2131 = vpack.c.bf16 %v2130, %v2130
        %v2132 = vlaneseq
        %v2133 = vshrl.u32 %v2132, 7
        %v2134 = vsub.s32 2, %v2133
        %v2135 = vrot.slane %v1312, %v2134
        %v2140 = vunpack.c.l.b16 %v1298
        %v2141 = vunpack.c.l.b16 %v1299
        %v2142 = vunpack.c.l.b16 %v1300
        %v2143 = vunpack.c.l.b16 %v1301
        %v2144 = vpack.c.b16 %v2141, %v2140
        %v2145 = vpack.c.b16 %v2143, %v2142
        %v2149 = vsel %vm322, %v2131, 0
        %2151 = vmatprep.subr.bf16.mxu0 0
        %2152 = vmatpush1.bf16.msra.mxu0 0
        %2153 = vmatprep.subr.bf16.mxu0 0
        %2154 = vmatpush1.bf16.msra.mxu0 0
        %2155 = vmatprep.subr.bf16.mxu0 0
        %2156 = vmatpush1.bf16.msra.mxu0 0
        %2157 = vmatprep.subr.bf16.mxu0 0
        %2158 = vmatpush1.bf16.msra.mxu0 0
        %2159 = vmatprep.subr.bf16.mxu0 0
        %2160 = vmatpush1.bf16.msra.mxu0 0
        %2161 = vmatprep.subr.bf16.mxu0 0
        %2162 = vmatpush1.bf16.msra.mxu0 0
        %2163 = vmatprep.subr.bf16.mxu0 0
        %2164 = vmatpush1.bf16.msra.mxu0 %v2145
        %2165 = vmatprep.subr.bf16.mxu0 0
        %2166 = vmatpush1.bf16.msra.mxu0 %v2144
        %2167 = vmatprep.subr.bf16.mxu0 0
        %2168 = vmatpush2.bf16.msra.mxu0 0
        %2169 = vmatprep.subr.bf16.mxu0 0
        %2170 = vmatpush2.bf16.msra.mxu0 0
        %2171 = vmatprep.subr.bf16.mxu0 0
        %2172 = vmatpush2.bf16.msra.mxu0 0
        %2173 = vmatprep.subr.bf16.mxu0 0
        %2174 = vmatpush2.bf16.msra.mxu0 0
        %2175 = vmatprep.subr.bf16.mxu0 0
        %2176 = vmatpush2.bf16.msra.mxu0 0
        %2177 = vmatprep.subr.bf16.mxu0 0
        %2178 = vmatpush2.bf16.msra.mxu0 0
        %2179 = vmatprep.subr.bf16.mxu0 0
        %2180 = vmatpush2.bf16.msra.mxu0 0
        %2181 = vmatprep.subr.bf16.mxu0 0
        %2182 = vmatpush2.bf16.msra.mxu0 0
        %2183 = vmatprep.mubr.bf16.mxu0 0
        %2184 = vmatmul.mubr.bf16.gmra.mxu0 %v2149
        %v2185 = vpop.f32.mrf.mxu0
        %v2186 = vadd.f32 %v2135, %v2185
        %v2187 = vpop.f32.mrf.mxu0
        %v2188 = vpop.f32.mrf.mxu0
        %v2189 = vpop.f32.mrf.mxu0
        %2190 = vdwg.mxu0
        %v2191 = vmax.f32 %v2186, 0.0
        %v2192 = vpack.c.bf16 %v2191, %v2191
        %v2193 = vlaneseq
        %v2194 = vshrl.u32 %v2193, 7
        %v2195 = vsub.s32 3, %v2194
        %v2196 = vrot.slane %v1312, %v2195
        %v2205 = vunpack.c.l.b16 %v1303
        %v2206 = vunpack.c.l.b16 %v1304
        %v2207 = vunpack.c.l.b16 %v1305
        %v2208 = vunpack.c.l.b16 %v1306
        %v2209 = vunpack.c.l.b16 %v1307
        %v2210 = vunpack.c.l.b16 %v1308
        %v2211 = vunpack.c.l.b16 %v1309
        %v2212 = vunpack.c.l.b16 %v1310
        %v2213 = vpack.c.b16 %v2206, %v2205
        %v2214 = vpack.c.b16 %v2208, %v2207
        %v2215 = vpack.c.b16 %v2210, %v2209
        %v2216 = vpack.c.b16 %v2212, %v2211
        %v2222 = vsel %vm1218, %v2192, 0
        %2224 = vmatprep.subr.bf16.mxu0 0
        %2225 = vmatpush1.bf16.msra.mxu0 0
        %2226 = vmatprep.subr.bf16.mxu0 0
        %2227 = vmatpush1.bf16.msra.mxu0 0
        %2228 = vmatprep.subr.bf16.mxu0 0
        %2229 = vmatpush1.bf16.msra.mxu0 0
        %2230 = vmatprep.subr.bf16.mxu0 0
        %2231 = vmatpush1.bf16.msra.mxu0 0
        %2232 = vmatprep.subr.bf16.mxu0 0
        %2233 = vmatpush1.bf16.msra.mxu0 %v2216
        %2234 = vmatprep.subr.bf16.mxu0 0
        %2235 = vmatpush1.bf16.msra.mxu0 %v2215
        %2236 = vmatprep.subr.bf16.mxu0 0
        %2237 = vmatpush1.bf16.msra.mxu0 %v2214
        %2238 = vmatprep.subr.bf16.mxu0 0
        %2239 = vmatpush1.bf16.msra.mxu0 %v2213
        %2240 = vmatprep.subr.bf16.mxu0 0
        %2241 = vmatpush2.bf16.msra.mxu0 0
        %2242 = vmatprep.subr.bf16.mxu0 0
        %2243 = vmatpush2.bf16.msra.mxu0 0
        %2244 = vmatprep.subr.bf16.mxu0 0
        %2245 = vmatpush2.bf16.msra.mxu0 0
        %2246 = vmatprep.subr.bf16.mxu0 0
        %2247 = vmatpush2.bf16.msra.mxu0 0
        %2248 = vmatprep.subr.bf16.mxu0 0
        %2249 = vmatpush2.bf16.msra.mxu0 0
        %2250 = vmatprep.subr.bf16.mxu0 0
        %2251 = vmatpush2.bf16.msra.mxu0 0
        %2252 = vmatprep.subr.bf16.mxu0 0
        %2253 = vmatpush2.bf16.msra.mxu0 0
        %2254 = vmatprep.subr.bf16.mxu0 0
        %2255 = vmatpush2.bf16.msra.mxu0 0
        %2256 = vmatprep.mubr.bf16.mxu0 0
        %2257 = vmatmul.mubr.bf16.gmra.mxu0 %v2222
        %v2258 = vpop.f32.mrf.mxu0
        %v2259 = vadd.f32 %v2196, %v2258
        %v2260 = vpop.f32.mrf.mxu0
        %v2261 = vpop.f32.mrf.mxu0
        %v2262 = vpop.f32.mrf.mxu0
        %2263 = vdwg.mxu0
        %v2264 = vadd.f32 %v2130, %v2259
        %v2265 = vsel %vm322, %v2264, 0.0
        %2266 = vadd.xlane.f32.xlu0 %v2265
        %v2267 = vpop.xlane.xlu0 %2266
        %v2268 = vmul.f32 %v2267, %v1107
        %v2269 = vsub.f32 %v2264, %v2268
        %v2270 = vmul.f32 %v2269, %v2269
        %v2271 = vsel %vm322, %v2270, 0.0
        %2272 = vadd.xlane.f32.xlu0 %v2271
        %v2273 = vpop.xlane.xlu0 %2272
        %v2274 = vmul.f32 %v2273, %v1107
        %v2275 = vadd.f32 %v2274, 1e-05
        %v2276 = vrsqrt.pop %v2275
        %v2277 = vmul.f32 %v2269, %v2276
        %v2278 = vlaneseq
        %v2279 = vshrl.u32 %v2278, 7
        %v2280 = vsub.s32 6, %v2279
        %v2281 = vrot.slane %v1312, %v2280
        %v2282 = vmul.f32 %v2277, %v2281
        %v2283 = vlaneseq
        %v2284 = vshrl.u32 %v2283, 7
        %v2285 = vsub.s32 7, %v2284
        %v2286 = vrot.slane %v1312, %v2285
        %v2287 = vadd.f32 %v2282, %v2286
        %s2288 = scalar_lea.vmem %s281, 8 [#allocation7]
        %2289 = vst.msk [vmem:[%s2288] sm:$0xff] %vm322, %v2287
        %s2290 = sand.u32 %s163, 1
        %s2291 = scalar_lea.sflag [#allocation4], %s2290
        %s2292 = sand.u32 %s163, 1
        %s2293 = smul.addr %s2292, 16
        %s2294 = scalar_lea.vmem [#allocation7], %s2293
        // Predicated region
        $region53: #{tpu_custom_call.1} parent=43 // pred_check
          %p2295 = pneg %p173
        $region54: #{tpu_custom_call.1} parent=43 // pred_check_branch
          %2297 = sbr.rel (%p2295) target = $region56
        $region55: #{tpu_custom_call.1} parent=43 // pred_region
          %s2299 = ssub.s32 256, 256
          %2300 = vsyncadd %s2291, %s2299
          %s2301 = smul.addr %s24, 2
          %s2302 = smul.addr %s2301, 128
          %s2303 = scalar_lea.hbm %s6, %s2302
          %s2304 = sshll.u32 %s2294, 4
          %s2305 = int_to_ptr.vmem [resolvable:$true] %s2304
          %2310 = dma.vmem_to_hbm [thread:$0]  %s2305, 256, %s2303, %s2291, 128, 128, 8
        $region56: #{tpu_custom_call.1} parent=43 // pred_fallthru
          _
      $region44: #{tpu_custom_call.1} parent=5 // pred_fallthru
        _
      %p2311 = scmp.le.s32.totalorder 2, %s19
      // Predicated region
      $region57: #{tpu_custom_call.1} parent=5 // pred_check
        %p2312 = pneg %p2311
      $region58: #{tpu_custom_call.1} parent=5 // pred_check_branch
        %2314 = sbr.rel (%p2312) target = $region60
      $region59: #{tpu_custom_call.1} parent=5 // pred_region
        %s2315 = ssub.s32 %s19, 2
        // Predicated region
        $region61: #{tpu_custom_call.1} parent=59 // pred_check
          %p2316 = pneg %p179
        $region62: #{tpu_custom_call.1} parent=59 // pred_check_branch
          %2318 = sbr.rel (%p2316) target = $region64
        $region63: #{tpu_custom_call.1} parent=59 // pred_region
          %s2319 = sand.u32 %s164, 1
          %s2320 = scalar_lea.sflag [#allocation4], %s2319
          %s2321 = sand.u32 %s164, 1
          %s2322 = smul.addr %s2321, 16
          %s2323 = scalar_lea.vmem [#allocation7], %s2322
          %2324 = dma.done %s2320, 256
        $region64: #{tpu_custom_call.1} parent=59 // pred_fallthru
          _
      $region60: #{tpu_custom_call.1} parent=5 // pred_fallthru
        _
    $region6: #{tpu_custom_call.1} parent=1 // loop_footer
      %s23 = sadd.s32 1, %s19
    $region7: #{tpu_custom_call.1} parent=1 // loop_footer_branch
      %18 = sbr.rel target = $region3
    $region8: #{tpu_custom_call.1} parent=1 // loop_exit
      _
    %2325 = vsyncpa [#allocation3], 1
    %s2326 = scalar_lea.sflag [#allocation3], 1
    %2327 = vsyncpa %s2326, 1
    %2328 = vsyncpa [#allocation6], 1
    %2329 = vsyncpa [#allocation4], 1
    %s2330 = scalar_lea.sflag [#allocation4], 1
    %2331 = vsyncpa %s2330, 1

</llo_original>
